<compile_context>
chip_gen: v5e
topology: v5e:2x2
jax: 0.10.0
libtpu: 0.0.40
codegen_flags: <defaults>
</compile_context>

<pallas_src>
import functools

import jax
import jax.numpy as jnp
from jax import lax
from jax.experimental import pallas as pl
from jax.experimental.pallas import tpu as pltpu

LATENT_D = 32
HIDDEN = 512
IN_FEATURES = 23 * 9       # 207
K_PADDED = 256             # input features zero-padded to an MXU-friendly K
HEAD_PADDED = 128          # fused (mu|sigma) head padded to one full lane group


def _round_up(x, m):
    return (x + m - 1) // m * m


def _leaky_relu(x, negative_slope=0.01):
    return jnp.where(x > 0, x, negative_slope * x)


def _softplus(x):
    # numerically-stable softplus, matches F.softplus(beta=1)
    return jnp.maximum(x, 0.0) + jnp.log1p(jnp.exp(-jnp.abs(x)))


def vposer_encoder_kernel(latent_d, x_ref, w1_ref, b1_ref, w2_ref, b2_ref,
                          wh_ref, bh_ref, out_ref):
    wdt = w1_ref.dtype                       # f32 or bf16 (MXU input dtype)
    x = x_ref[...].astype(wdt)               # (TB, 256)

    # fc1 + leaky_relu (bias add / activation kept in f32)
    h1 = jnp.dot(x, w1_ref[...], preferred_element_type=jnp.float32) + b1_ref[...]
    h1 = _leaky_relu(h1)

    # F.dropout(p=0.2, training=False) -> identity (eval mode)

    # fc2 + leaky_relu
    h2 = jnp.dot(h1.astype(wdt), w2_ref[...],
                 preferred_element_type=jnp.float32) + b2_ref[...]
    h2 = _leaky_relu(h2)

    # fused Zmu|Zsigma head: single (512, 128) matmul, lane-dense output.
    head = jnp.dot(h2.astype(wdt), wh_ref[...],
                   preferred_element_type=jnp.float32) + bh_ref[...]

    # softplus applies only to the sigma columns (>= latent_d); padded columns
    # beyond 2*latent_d are sliced off in the wrapper, so their value is moot.
    col = lax.broadcasted_iota(jnp.int32, head.shape, 1)
    out_ref[...] = jnp.where(col >= latent_d, _softplus(head), head)


def init_params(key, latentD=LATENT_D, hidden=HIDDEN, in_features=IN_FEATURES):
    """Deterministic synthetic parameter init (shapes match the nn.Linear layers),
    stored transposed ((in, out)) so the kernel computes y = x @ W + b."""
    ks = jax.random.split(key, 8)

    def linear(kw, kb, fan_in, fan_out):
        bound = 1.0 / jnp.sqrt(fan_in)
        w = jax.random.uniform(kw, (fan_in, fan_out), jnp.float32, -bound, bound)
        b = jax.random.uniform(kb, (1, fan_out), jnp.float32, -bound, bound)
        return w, b

    w1, b1 = linear(ks[0], ks[1], in_features, hidden)
    w2, b2 = linear(ks[2], ks[3], hidden, hidden)
    wmu, bmu = linear(ks[4], ks[5], hidden, latentD)
    wsig, bsig = linear(ks[6], ks[7], hidden, latentD)
    return dict(w1=w1, b1=b1, w2=w2, b2=b2, wmu=wmu, bmu=bmu, wsig=wsig, bsig=bsig)


def pack_params(params, param_dtype=jnp.float32):
    """Pad / fuse raw params into the kernel layout (do this once per model).
       - w1 rows zero-padded 207 -> 256
       - wmu|wsig fused and zero-padded to (512, 128); biases likewise
       - weights cast to `param_dtype` (bf16 for v6e/v7x), biases kept f32."""
    latent_d = params["wmu"].shape[1]
    in_f = params["w1"].shape[0]

    w1 = jnp.pad(params["w1"], ((0, K_PADDED - in_f), (0, 0)))
    wh = jnp.concatenate([params["wmu"], params["wsig"]], axis=1)
    wh = jnp.pad(wh, ((0, 0), (0, HEAD_PADDED - 2 * latent_d)))
    bh = jnp.concatenate([params["bmu"], params["bsig"]], axis=1)
    bh = jnp.pad(bh, ((0, 0), (0, HEAD_PADDED - 2 * latent_d)))

    return dict(
        latent_d=latent_d,
        w1=w1.astype(param_dtype),
        b1=params["b1"].astype(jnp.float32),
        w2=params["w2"].astype(param_dtype),
        b2=params["b2"].astype(jnp.float32),
        wh=wh.astype(param_dtype),
        bh=bh.astype(jnp.float32),
    )


def vposer_encoder_forward(x, packed, *, block_b=256):
    """x: (B, 23, 9) or (B, 207).  Returns (loc, scale) of the Normal posterior."""
    latent_d = packed["latent_d"]
    w1, b1 = packed["w1"], packed["b1"]
    w2, b2 = packed["w2"], packed["b2"]
    wh, bh = packed["wh"], packed["bh"]
    K, H = w1.shape                     # (256, 512)
    NH = wh.shape[1]                    # 128

    B = x.shape[0]
    x2 = x.reshape(B, -1).astype(jnp.float32)
    fin = x2.shape[1]
    if fin < K:                         # 207 -> 256 zero pad
        x2 = jnp.pad(x2, ((0, 0), (0, K - fin)))

    # Batch tiling: TB = block_b (pipelined multi-step grid) for large B,
    # otherwise a single sublane-aligned block.
    tb = _round_up(B, 8) if B <= block_b else block_b
    b_pad = _round_up(B, tb)
    if b_pad != B:
        x2 = jnp.pad(x2, ((0, b_pad - B), (0, 0)))
    grid = (b_pad // tb,)

    wbytes = sum(int(a.size) * a.dtype.itemsize for a in (w1, b1, w2, b2, wh, bh))
    cost = pl.CostEstimate(
        flops=2 * b_pad * (K * H + H * H + H * NH),
        transcendentals=b_pad * NH,
        bytes_accessed=wbytes + int(x2.size) * 4 + b_pad * NH * 4,
    )

    head = pl.pallas_call(
        functools.partial(vposer_encoder_kernel, latent_d),
        grid=grid,
        in_specs=[
            pl.BlockSpec((tb, K), lambda i: (i, 0)),   # x: tiled over batch
            pl.BlockSpec((K, H), lambda i: (0, 0)),    # w1: VMEM-resident
            pl.BlockSpec((1, H), lambda i: (0, 0)),    # b1
            pl.BlockSpec((H, H), lambda i: (0, 0)),    # w2
            pl.BlockSpec((1, H), lambda i: (0, 0)),    # b2
            pl.BlockSpec((H, NH), lambda i: (0, 0)),   # fused head weight
            pl.BlockSpec((1, NH), lambda i: (0, 0)),   # fused head bias
        ],
        out_specs=pl.BlockSpec((tb, NH), lambda i: (i, 0)),
        out_shape=jax.ShapeDtypeStruct((b_pad, NH), jnp.float32),
        compiler_params=pltpu.CompilerParams(
            dimension_semantics=("parallel",)),        # megacore on v7x
        cost_estimate=cost,
    )(x2, w1, b1, w2, b2, wh, bh)

    mu = head[:B, :latent_d]
    sigma = head[:B, latent_d:2 * latent_d]
    # TODO(synk): torch.distributions.Normal has no Pallas equivalent; we
    # return its (loc, scale) parameters instead.
    return mu, sigma


def vposer_encoder_ref(x, params):
    """Pure-JAX reference (unpacked f32 params) for correctness checking."""
    B = x.shape[0]
    x2 = x.reshape(B, -1).astype(jnp.float32)
    h1 = _leaky_relu(x2 @ params["w1"] + params["b1"])
    h2 = _leaky_relu(h1 @ params["w2"] + params["b2"])
    mu = h2 @ params["wmu"] + params["bmu"]
    sigma = _softplus(h2 @ params["wsig"] + params["bsig"])
    return mu, sigma


if __name__ == "__main__":
    key = jax.random.PRNGKey(0)
    k_params, k_x, k_x2 = jax.random.split(key, 3)

    params = init_params(k_params)

    # --- small batch (single grid step), f32 weights: strict check ----------
    B = 2
    x = jax.random.normal(k_x, (B, 23, 9), dtype=jnp.float32)
    mu_ref, sigma_ref = vposer_encoder_ref(x, params)

    packed_f32 = pack_params(params, param_dtype=jnp.float32)
    mu, sigma = vposer_encoder_forward(x, packed_f32)
    jax.block_until_ready((mu, sigma))
    assert mu.shape == (B, LATENT_D) and sigma.shape == (B, LATENT_D)
    assert jnp.allclose(mu, mu_ref, atol=1e-4, rtol=1e-4)
    assert jnp.allclose(sigma, sigma_ref, atol=1e-4, rtol=1e-4)
    assert bool(jnp.all(sigma > 0))

    # --- larger batch exercising the tiled/pipelined multi-step grid --------
    B2 = 300
    xb = jax.random.normal(k_x2, (B2, 23, 9), dtype=jnp.float32)
    mu2_ref, sigma2_ref = vposer_encoder_ref(xb, params)
    mu2, sigma2 = vposer_encoder_forward(xb, packed_f32, block_b=128)
    jax.block_until_ready((mu2, sigma2))
    assert mu2.shape == (B2, LATENT_D) and sigma2.shape == (B2, LATENT_D)
    assert jnp.allclose(mu2, mu2_ref, atol=1e-4, rtol=1e-4)
    assert jnp.allclose(sigma2, sigma2_ref, atol=1e-4, rtol=1e-4)

    # --- bf16 weights (v6e/v7x MXU fast path): loose check -------------------
    packed_bf16 = pack_params(params, param_dtype=jnp.bfloat16)
    mu_b, sigma_b = vposer_encoder_forward(x, packed_bf16)
    jax.block_until_ready((mu_b, sigma_b))
    assert jnp.allclose(mu_b, mu_ref, atol=1e-1, rtol=1e-1)
    assert jnp.allclose(sigma_b, sigma_ref, atol=1e-1, rtol=1e-1)
    assert bool(jnp.all(sigma_b > 0))

    print("KERNEL_OK")
</pallas_src>

<mosaic_0001>
module attributes {stable_mosaic.version = 11 : i64} {
  func.func @vposer_encoder_kernel(%arg0: i32, %arg1: memref<8x256xf32, #tpu.memory_space<vmem>>, %arg2: memref<256x512xf32, #tpu.memory_space<vmem>>, %arg3: memref<1x512xf32, #tpu.memory_space<vmem>>, %arg4: memref<512x512xf32, #tpu.memory_space<vmem>>, %arg5: memref<1x512xf32, #tpu.memory_space<vmem>>, %arg6: memref<512x128xf32, #tpu.memory_space<vmem>>, %arg7: memref<1x128xf32, #tpu.memory_space<vmem>>, %arg8: memref<8x128xf32, #tpu.memory_space<vmem>>) attributes {dimension_semantics = [#tpu.dimension_semantics<parallel>], iteration_bounds = array<i64: 1>, scalar_prefetch = 0 : i64, scratch_operands = 0 : i64, tpu.core_type = #tpu.core_type<tc>, window_params = [{transform_indices = @transform_0, window_bounds = array<i64: 8, 256>}, {pipeline_mode = #tpu.pipeline_mode<synchronous>, transform_indices = @transform_1, window_bounds = array<i64: 256, 512>}, {pipeline_mode = #tpu.pipeline_mode<synchronous>, transform_indices = @transform_2, window_bounds = array<i64: 1, 512>}, {pipeline_mode = #tpu.pipeline_mode<synchronous>, transform_indices = @transform_3, window_bounds = array<i64: 512, 512>}, {pipeline_mode = #tpu.pipeline_mode<synchronous>, transform_indices = @transform_4, window_bounds = array<i64: 1, 512>}, {pipeline_mode = #tpu.pipeline_mode<synchronous>, transform_indices = @transform_5, window_bounds = array<i64: 512, 128>}, {pipeline_mode = #tpu.pipeline_mode<synchronous>, transform_indices = @transform_6, window_bounds = array<i64: 1, 128>}, {transform_indices = @transform_7, window_bounds = array<i64: 8, 128>}]} {
    %c0 = arith.constant 0 : index
    %c0_0 = arith.constant 0 : index
    %0 = vector.load %arg1[%c0, %c0_0] : memref<8x256xf32, #tpu.memory_space<vmem>>, vector<8x256xf32>
    %c0_1 = arith.constant 0 : index
    %c0_2 = arith.constant 0 : index
    %1 = vector.load %arg2[%c0_1, %c0_2] : memref<256x512xf32, #tpu.memory_space<vmem>>, vector<256x512xf32>
    %cst = arith.constant dense<0.000000e+00> : vector<8x512xf32>
    %2 = tpu.matmul %0, %1, %cst {dimension_numbers = #tpu.dot_dimension_numbers<[1], [0], [0], [1], [0, 0, 1, 1], [], []>} : vector<8x256xf32>, vector<256x512xf32>, vector<8x512xf32> -> vector<8x512xf32>
    %c0_3 = arith.constant 0 : index
    %c0_4 = arith.constant 0 : index
    %3 = vector.load %arg3[%c0_3, %c0_4] : memref<1x512xf32, #tpu.memory_space<vmem>>, vector<1x512xf32>
    %4 = vector.broadcast %3 : vector<1x512xf32> to vector<8x512xf32>
    %5 = arith.addf %2, %4 : vector<8x512xf32>
    %cst_5 = arith.constant 0.000000e+00 : f32
    %6 = vector.broadcast %cst_5 : f32 to vector<8x512xf32>
    %7 = arith.cmpf ogt, %5, %6 : vector<8x512xf32>
    %cst_6 = arith.constant 0.00999999977 : f32
    %8 = vector.broadcast %cst_6 : f32 to vector<8x512xf32>
    %9 = arith.mulf %8, %5 : vector<8x512xf32>
    %10 = arith.select %7, %5, %9 : vector<8x512xi1>, vector<8x512xf32>
    %c0_7 = arith.constant 0 : index
    %c0_8 = arith.constant 0 : index
    %11 = vector.load %arg4[%c0_7, %c0_8] : memref<512x512xf32, #tpu.memory_space<vmem>>, vector<512x512xf32>
    %cst_9 = arith.constant dense<0.000000e+00> : vector<8x512xf32>
    %12 = tpu.matmul %10, %11, %cst_9 {dimension_numbers = #tpu.dot_dimension_numbers<[1], [0], [0], [1], [0, 0, 1, 1], [], []>} : vector<8x512xf32>, vector<512x512xf32>, vector<8x512xf32> -> vector<8x512xf32>
    %c0_10 = arith.constant 0 : index
    %c0_11 = arith.constant 0 : index
    %13 = vector.load %arg5[%c0_10, %c0_11] : memref<1x512xf32, #tpu.memory_space<vmem>>, vector<1x512xf32>
    %14 = vector.broadcast %13 : vector<1x512xf32> to vector<8x512xf32>
    %15 = arith.addf %12, %14 : vector<8x512xf32>
    %cst_12 = arith.constant 0.000000e+00 : f32
    %16 = vector.broadcast %cst_12 : f32 to vector<8x512xf32>
    %17 = arith.cmpf ogt, %15, %16 : vector<8x512xf32>
    %cst_13 = arith.constant 0.00999999977 : f32
    %18 = vector.broadcast %cst_13 : f32 to vector<8x512xf32>
    %19 = arith.mulf %18, %15 : vector<8x512xf32>
    %20 = arith.select %17, %15, %19 : vector<8x512xi1>, vector<8x512xf32>
    %c0_14 = arith.constant 0 : index
    %c0_15 = arith.constant 0 : index
    %21 = vector.load %arg6[%c0_14, %c0_15] : memref<512x128xf32, #tpu.memory_space<vmem>>, vector<512x128xf32>
    %cst_16 = arith.constant dense<0.000000e+00> : vector<8x128xf32>
    %22 = tpu.matmul %20, %21, %cst_16 {dimension_numbers = #tpu.dot_dimension_numbers<[1], [0], [0], [1], [0, 0, 1, 1], [], []>} : vector<8x512xf32>, vector<512x128xf32>, vector<8x128xf32> -> vector<8x128xf32>
    %c0_17 = arith.constant 0 : index
    %c0_18 = arith.constant 0 : index
    %23 = vector.load %arg7[%c0_17, %c0_18] : memref<1x128xf32, #tpu.memory_space<vmem>>, vector<1x128xf32>
    %24 = vector.broadcast %23 : vector<1x128xf32> to vector<8x128xf32>
    %25 = arith.addf %22, %24 : vector<8x128xf32>
    %26 = tpu.iota {dimensions = array<i32: 1>} : vector<8x128xi32>
    %c32_i32 = arith.constant 32 : i32
    %27 = vector.broadcast %c32_i32 : i32 to vector<8x128xi32>
    %28 = arith.cmpi sge, %26, %27 : vector<8x128xi32>
    %cst_19 = arith.constant 0.000000e+00 : f32
    %29 = vector.broadcast %cst_19 : f32 to vector<8x128xf32>
    %30 = arith.maximumf %25, %29 : vector<8x128xf32>
    %31 = math.absf %25 : vector<8x128xf32>
    %cst_20 = arith.constant 0.000000e+00 : f32
    %32 = vector.broadcast %cst_20 : f32 to vector<8x128xf32>
    %33 = arith.subf %32, %31 : vector<8x128xf32>
    %34 = math.exp %33 : vector<8x128xf32>
    %35 = math.log1p %34 : vector<8x128xf32>
    %36 = arith.addf %30, %35 : vector<8x128xf32>
    %37 = arith.select %28, %36, %25 : vector<8x128xi1>, vector<8x128xf32>
    %c0_21 = arith.constant 0 : index
    %c0_22 = arith.constant 0 : index
    %38 = vector.load %arg8[%c0_21, %c0_22] : memref<8x128xf32, #tpu.memory_space<vmem>>, vector<8x128xf32>
    tpu.vector_store %arg8[%c0_21, %c0_22], %37 {strides = array<i32>} : memref<8x128xf32, #tpu.memory_space<vmem>>, vector<8x128xf32>,
    return
  }
  func.func @transform_0(%arg0: i32) -> (i32, i32) {
    %c0_i32 = arith.constant 0 : i32
    %c0_i32_0 = arith.constant 0 : i32
    return %arg0, %c0_i32 : i32, i32
  }
  func.func @transform_1(%arg0: i32) -> (i32, i32) {
    %c0_i32 = arith.constant 0 : i32
    %c0_i32_0 = arith.constant 0 : i32
    %c0_i32_1 = arith.constant 0 : i32
    return %c0_i32, %c0_i32_0 : i32, i32
  }
  func.func @transform_2(%arg0: i32) -> (i32, i32) {
    %c0_i32 = arith.constant 0 : i32
    %c0_i32_0 = arith.constant 0 : i32
    %c0_i32_1 = arith.constant 0 : i32
    return %c0_i32, %c0_i32_0 : i32, i32
  }
  func.func @transform_3(%arg0: i32) -> (i32, i32) {
    %c0_i32 = arith.constant 0 : i32
    %c0_i32_0 = arith.constant 0 : i32
    %c0_i32_1 = arith.constant 0 : i32
    return %c0_i32, %c0_i32_0 : i32, i32
  }
  func.func @transform_4(%arg0: i32) -> (i32, i32) {
    %c0_i32 = arith.constant 0 : i32
    %c0_i32_0 = arith.constant 0 : i32
    %c0_i32_1 = arith.constant 0 : i32
    return %c0_i32, %c0_i32_0 : i32, i32
  }
  func.func @transform_5(%arg0: i32) -> (i32, i32) {
    %c0_i32 = arith.constant 0 : i32
    %c0_i32_0 = arith.constant 0 : i32
    %c0_i32_1 = arith.constant 0 : i32
    return %c0_i32, %c0_i32_0 : i32, i32
  }
  func.func @transform_6(%arg0: i32) -> (i32, i32) {
    %c0_i32 = arith.constant 0 : i32
    %c0_i32_0 = arith.constant 0 : i32
    %c0_i32_1 = arith.constant 0 : i32
    return %c0_i32, %c0_i32_0 : i32, i32
  }
  func.func @transform_7(%arg0: i32) -> (i32, i32) {
    %c0_i32 = arith.constant 0 : i32
    %c0_i32_0 = arith.constant 0 : i32
    return %arg0, %c0_i32 : i32, i32
  }
}

</mosaic_0001>

<llo_original>
// kernel: tpu_custom_call.1
$region0: #{tpu_custom_call.1}
  #allocation0 [shape = 'u32[]', space=smem, size = 0x4, offset = 0x4, fixed_abs, tag = 'smem constant byte address 0x4 - core index']
  #allocation1 [shape = 'u32[72,128]{1,0:T(1,128)}', space=vmem, size = 0x9000, scoped, tag = 'internal scratch']
  %s0 = inlined_call_operand.hbm [shape: f32[8,256], index: 0, kind: input, shape index: {}]
  %s1 = inlined_call_operand.hbm [shape: f32[256,512], index: 1, kind: input, shape index: {}]
  %s2 = inlined_call_operand.hbm [shape: f32[1,512], index: 2, kind: input, shape index: {}]
  %s3 = inlined_call_operand.hbm [shape: f32[512,512], index: 3, kind: input, shape index: {}]
  %s4 = inlined_call_operand.hbm [shape: f32[1,512], index: 4, kind: input, shape index: {}]
  %s5 = inlined_call_operand.hbm [shape: f32[512,128], index: 5, kind: input, shape index: {}]
  %s6 = inlined_call_operand.vmem [shape: f32[1,128], index: 6, kind: input, shape index: {}]
  %s7 = inlined_call_operand.hbm [shape: f32[8,128], index: 7, kind: output, shape index: {}]
  %s8 = sld [smem:[#allocation0]]
  $region62: #{tpu_custom_call.1} parent=0
    _
  %s10 = ssub.s32 1, %s8
  %s11 = scalar_select 0, %s10, %s8
  $region1: #{tpu_custom_call.1} parent=0
    #allocation2 [shape = 'u8[8192]{0}', space=vmem, size = 0x2000, scoped, tag = 'input window, operand 0, single buffered']
    #allocation3 [shape = 's32[1]{0}', space=sflag, size = 0x4, scoped, tag = 'scoped memory for tpu_custom_call.1']
    #allocation4 [shape = 's32[1]{0}', space=sflag, size = 0x4, scoped, tag = 'scoped memory for tpu_custom_call.1']
    #allocation5 [shape = 'u8[524288]{0}', space=vmem, size = 0x80000, scoped, tag = 'input window, operand 1, single buffered']
    #allocation6 [shape = 's32[1]{0}', space=sflag, size = 0x4, scoped, tag = 'scoped memory for tpu_custom_call.1']
    #allocation7 [shape = 'u8[2048]{0}', space=vmem, size = 0x800, scoped, tag = 'input window, operand 2, single buffered']
    #allocation8 [shape = 'u8[1048576]{0}', space=vmem, size = 0x100000, scoped, tag = 'input window, operand 3, single buffered']
    #allocation9 [shape = 's32[1]{0}', space=sflag, size = 0x4, scoped, tag = 'scoped memory for tpu_custom_call.1']
    #allocation10 [shape = 'u8[2048]{0}', space=vmem, size = 0x800, scoped, tag = 'input window, operand 4, single buffered']
    #allocation11 [shape = 'u8[262144]{0}', space=vmem, size = 0x40000, scoped, tag = 'input window, operand 5, single buffered']
    #allocation12 [shape = 's32[1]{0}', space=sflag, size = 0x4, scoped, tag = 'scoped memory for tpu_custom_call.1']
    #allocation13 [shape = 'u8[4096]{0}', space=vmem, size = 0x1000, scoped, tag = 'output window, operand 0, single buffered']
    %12 = vsyncpa [#allocation3], 0
    %13 = vsyncpa [#allocation6], 0
    %14 = vsyncpa [#allocation9], 0
    %15 = vsyncpa [#allocation12], 0
    %16 = vsyncpa [#allocation4], 0
    // Predicated region
    $region2: #{tpu_custom_call.1} parent=1 // pred_check
      _
    $region3: #{tpu_custom_call.1} parent=1 // pred_check_branch
      %18 = sbr.rel (0) target = $region5
    $region4: #{tpu_custom_call.1} parent=1 // pred_region
      %20 = vsyncadd [#allocation3], 0
      %s22 = sshll.u32 %s0, 4
      %s23 = int_to_ptr.hbm [resolvable:$true] %s22
      %s24 = sshll.u32 [#allocation2], 4
      %s25 = int_to_ptr.vmem [resolvable:$true] %s24
      %27 = dma.hbm_to_vmem [thread:$0]  %s23, 256, %s25, [#allocation3]
    $region5: #{tpu_custom_call.1} parent=1 // pred_fallthru
      _
    // Predicated region
    $region6: #{tpu_custom_call.1} parent=1 // pred_check
      _
    $region7: #{tpu_custom_call.1} parent=1 // pred_check_branch
      %29 = sbr.rel (0) target = $region9
    $region8: #{tpu_custom_call.1} parent=1 // pred_region
      %31 = vsyncadd [#allocation6], 0
      %s32 = sshll.u32 %s1, 4
      %s33 = int_to_ptr.hbm [resolvable:$true] %s32
      %s34 = sshll.u32 [#allocation5], 4
      %s35 = int_to_ptr.vmem [resolvable:$true] %s34
      %40 = dma.hbm_to_vmem [thread:$0]  %s33, 16384, %s35, [#allocation6], 512, 512, 32
    $region9: #{tpu_custom_call.1} parent=1 // pred_fallthru
      _
    // Predicated region
    $region10: #{tpu_custom_call.1} parent=1 // pred_check
      _
    $region11: #{tpu_custom_call.1} parent=1 // pred_check_branch
      %42 = sbr.rel (0) target = $region13
    $region12: #{tpu_custom_call.1} parent=1 // pred_region
      %44 = vsyncadd [#allocation6], 0
      %s46 = sshll.u32 %s2, 4
      %s47 = int_to_ptr.hbm [resolvable:$true] %s46
      %s48 = sshll.u32 [#allocation7], 4
      %s49 = int_to_ptr.vmem [resolvable:$true] %s48
      %51 = dma.hbm_to_vmem [thread:$0]  %s47, 64, %s49, [#allocation6]
    $region13: #{tpu_custom_call.1} parent=1 // pred_fallthru
      _
    // Predicated region
    $region14: #{tpu_custom_call.1} parent=1 // pred_check
      _
    $region15: #{tpu_custom_call.1} parent=1 // pred_check_branch
      %53 = sbr.rel (0) target = $region17
    $region16: #{tpu_custom_call.1} parent=1 // pred_region
      %55 = vsyncadd [#allocation9], 0
      %s56 = sshll.u32 %s3, 4
      %s57 = int_to_ptr.hbm [resolvable:$true] %s56
      %s58 = sshll.u32 [#allocation8], 4
      %s59 = int_to_ptr.vmem [resolvable:$true] %s58
      %64 = dma.hbm_to_vmem [thread:$0]  %s57, 32768, %s59, [#allocation9], 512, 512, 32
    $region17: #{tpu_custom_call.1} parent=1 // pred_fallthru
      _
    // Predicated region
    $region18: #{tpu_custom_call.1} parent=1 // pred_check
      _
    $region19: #{tpu_custom_call.1} parent=1 // pred_check_branch
      %66 = sbr.rel (0) target = $region21
    $region20: #{tpu_custom_call.1} parent=1 // pred_region
      %68 = vsyncadd [#allocation9], 0
      %s70 = sshll.u32 %s4, 4
      %s71 = int_to_ptr.hbm [resolvable:$true] %s70
      %s72 = sshll.u32 [#allocation10], 4
      %s73 = int_to_ptr.vmem [resolvable:$true] %s72
      %75 = dma.hbm_to_vmem [thread:$0]  %s71, 64, %s73, [#allocation9]
    $region21: #{tpu_custom_call.1} parent=1 // pred_fallthru
      _
    // Predicated region
    $region22: #{tpu_custom_call.1} parent=1 // pred_check
      _
    $region23: #{tpu_custom_call.1} parent=1 // pred_check_branch
      %77 = sbr.rel (0) target = $region25
    $region24: #{tpu_custom_call.1} parent=1 // pred_region
      %79 = vsyncadd [#allocation12], 0
      %s80 = sshll.u32 %s5, 4
      %s81 = int_to_ptr.hbm [resolvable:$true] %s80
      %s82 = sshll.u32 [#allocation11], 4
      %s83 = int_to_ptr.vmem [resolvable:$true] %s82
      %88 = dma.hbm_to_vmem [thread:$0]  %s81, 8192, %s83, [#allocation12], 128, 128, 8
    $region25: #{tpu_custom_call.1} parent=1 // pred_fallthru
      _
    // Predicated region
    $region26: #{tpu_custom_call.1} parent=1 // pred_check
      _
    $region27: #{tpu_custom_call.1} parent=1 // pred_check_branch
      %90 = sbr.rel (0) target = $region29
    $region28: #{tpu_custom_call.1} parent=1 // pred_region
      _
    $region29: #{tpu_custom_call.1} parent=1 // pred_fallthru
      _
    // Predicated region
    $region30: #{tpu_custom_call.1} parent=1 // pred_check
      _
    $region31: #{tpu_custom_call.1} parent=1 // pred_check_branch
      %92 = sbr.rel (0) target = $region33
    $region32: #{tpu_custom_call.1} parent=1 // pred_region
      %94 = dma.done [#allocation3], 256
    $region33: #{tpu_custom_call.1} parent=1 // pred_fallthru
      _
    // Predicated region
    $region34: #{tpu_custom_call.1} parent=1 // pred_check
      _
    $region35: #{tpu_custom_call.1} parent=1 // pred_check_branch
      %96 = sbr.rel (0) target = $region37
    $region36: #{tpu_custom_call.1} parent=1 // pred_region
      %98 = dma.done [#allocation6], 16384
    $region37: #{tpu_custom_call.1} parent=1 // pred_fallthru
      _
    // Predicated region
    $region38: #{tpu_custom_call.1} parent=1 // pred_check
      _
    $region39: #{tpu_custom_call.1} parent=1 // pred_check_branch
      %100 = sbr.rel (0) target = $region41
    $region40: #{tpu_custom_call.1} parent=1 // pred_region
      %102 = dma.done [#allocation6], 64
    $region41: #{tpu_custom_call.1} parent=1 // pred_fallthru
      _
    // Predicated region
    $region42: #{tpu_custom_call.1} parent=1 // pred_check
      _
    $region43: #{tpu_custom_call.1} parent=1 // pred_check_branch
      %104 = sbr.rel (0) target = $region45
    $region44: #{tpu_custom_call.1} parent=1 // pred_region
      %106 = dma.done [#allocation9], 32768
    $region45: #{tpu_custom_call.1} parent=1 // pred_fallthru
      _
    // Predicated region
    $region46: #{tpu_custom_call.1} parent=1 // pred_check
      _
    $region47: #{tpu_custom_call.1} parent=1 // pred_check_branch
      %108 = sbr.rel (0) target = $region49
    $region48: #{tpu_custom_call.1} parent=1 // pred_region
      %110 = dma.done [#allocation9], 64
    $region49: #{tpu_custom_call.1} parent=1 // pred_fallthru
      _
    // Predicated region
    $region50: #{tpu_custom_call.1} parent=1 // pred_check
      _
    $region51: #{tpu_custom_call.1} parent=1 // pred_check_branch
      %112 = sbr.rel (0) target = $region53
    $region52: #{tpu_custom_call.1} parent=1 // pred_region
      %114 = dma.done [#allocation12], 8192
    $region53: #{tpu_custom_call.1} parent=1 // pred_fallthru
      _
    %v115 = vld [vmem:[#allocation2] sm:$0xff]
    %v116 = vld [vmem:[#allocation2 + $0x8] sm:$0xff]
    %v117 = vld [vmem:[#allocation5] sm:$0xff]
    %v118 = vld [vmem:[#allocation5 + $0x8] sm:$0xff]
    %v119 = vld [vmem:[#allocation5 + $0x10] sm:$0xff]
    %v120 = vld [vmem:[#allocation5 + $0x18] sm:$0xff]
    %v121 = vld [vmem:[#allocation5 + $0x20] sm:$0xff]
    %v122 = vld [vmem:[#allocation5 + $0x28] sm:$0xff]
    %v123 = vld [vmem:[#allocation5 + $0x30] sm:$0xff]
    %v124 = vld [vmem:[#allocation5 + $0x38] sm:$0xff]
    %v125 = vld [vmem:[#allocation5 + $0x40] sm:$0xff]
    %v126 = vld [vmem:[#allocation5 + $0x48] sm:$0xff]
    %v127 = vld [vmem:[#allocation5 + $0x50] sm:$0xff]
    %v128 = vld [vmem:[#allocation5 + $0x58] sm:$0xff]
    %v129 = vld [vmem:[#allocation5 + $0x60] sm:$0xff]
    %v130 = vld [vmem:[#allocation5 + $0x68] sm:$0xff]
    %v131 = vld [vmem:[#allocation5 + $0x70] sm:$0xff]
    %v132 = vld [vmem:[#allocation5 + $0x78] sm:$0xff]
    %v133 = vld [vmem:[#allocation5 + $0x80] sm:$0xff]
    %v134 = vld [vmem:[#allocation5 + $0x88] sm:$0xff]
    %v135 = vld [vmem:[#allocation5 + $0x90] sm:$0xff]
    %v136 = vld [vmem:[#allocation5 + $0x98] sm:$0xff]
    %v137 = vld [vmem:[#allocation5 + $0xa0] sm:$0xff]
    %v138 = vld [vmem:[#allocation5 + $0xa8] sm:$0xff]
    %v139 = vld [vmem:[#allocation5 + $0xb0] sm:$0xff]
    %v140 = vld [vmem:[#allocation5 + $0xb8] sm:$0xff]
    %v141 = vld [vmem:[#allocation5 + $0xc0] sm:$0xff]
    %v142 = vld [vmem:[#allocation5 + $0xc8] sm:$0xff]
    %v143 = vld [vmem:[#allocation5 + $0xd0] sm:$0xff]
    %v144 = vld [vmem:[#allocation5 + $0xd8] sm:$0xff]
    %v145 = vld [vmem:[#allocation5 + $0xe0] sm:$0xff]
    %v146 = vld [vmem:[#allocation5 + $0xe8] sm:$0xff]
    %v147 = vld [vmem:[#allocation5 + $0xf0] sm:$0xff]
    %v148 = vld [vmem:[#allocation5 + $0xf8] sm:$0xff]
    %v149 = vld [vmem:[#allocation5 + $0x100] sm:$0xff]
    %v150 = vld [vmem:[#allocation5 + $0x108] sm:$0xff]
    %v151 = vld [vmem:[#allocation5 + $0x110] sm:$0xff]
    %v152 = vld [vmem:[#allocation5 + $0x118] sm:$0xff]
    %v153 = vld [vmem:[#allocation5 + $0x120] sm:$0xff]
    %v154 = vld [vmem:[#allocation5 + $0x128] sm:$0xff]
    %v155 = vld [vmem:[#allocation5 + $0x130] sm:$0xff]
    %v156 = vld [vmem:[#allocation5 + $0x138] sm:$0xff]
    %v157 = vld [vmem:[#allocation5 + $0x140] sm:$0xff]
    %v158 = vld [vmem:[#allocation5 + $0x148] sm:$0xff]
    %v159 = vld [vmem:[#allocation5 + $0x150] sm:$0xff]
    %v160 = vld [vmem:[#allocation5 + $0x158] sm:$0xff]
    %v161 = vld [vmem:[#allocation5 + $0x160] sm:$0xff]
    %v162 = vld [vmem:[#allocation5 + $0x168] sm:$0xff]
    %v163 = vld [vmem:[#allocation5 + $0x170] sm:$0xff]
    %v164 = vld [vmem:[#allocation5 + $0x178] sm:$0xff]
    %v165 = vld [vmem:[#allocation5 + $0x180] sm:$0xff]
    %v166 = vld [vmem:[#allocation5 + $0x188] sm:$0xff]
    %v167 = vld [vmem:[#allocation5 + $0x190] sm:$0xff]
    %v168 = vld [vmem:[#allocation5 + $0x198] sm:$0xff]
    %v169 = vld [vmem:[#allocation5 + $0x1a0] sm:$0xff]
    %v170 = vld [vmem:[#allocation5 + $0x1a8] sm:$0xff]
    %v171 = vld [vmem:[#allocation5 + $0x1b0] sm:$0xff]
    %v172 = vld [vmem:[#allocation5 + $0x1b8] sm:$0xff]
    %v173 = vld [vmem:[#allocation5 + $0x1c0] sm:$0xff]
    %v174 = vld [vmem:[#allocation5 + $0x1c8] sm:$0xff]
    %v175 = vld [vmem:[#allocation5 + $0x1d0] sm:$0xff]
    %v176 = vld [vmem:[#allocation5 + $0x1d8] sm:$0xff]
    %v177 = vld [vmem:[#allocation5 + $0x1e0] sm:$0xff]
    %v178 = vld [vmem:[#allocation5 + $0x1e8] sm:$0xff]
    %v179 = vld [vmem:[#allocation5 + $0x1f0] sm:$0xff]
    %v180 = vld [vmem:[#allocation5 + $0x1f8] sm:$0xff]
    %v181 = vld [vmem:[#allocation5 + $0x200] sm:$0xff]
    %v182 = vld [vmem:[#allocation5 + $0x208] sm:$0xff]
    %v183 = vld [vmem:[#allocation5 + $0x210] sm:$0xff]
    %v184 = vld [vmem:[#allocation5 + $0x218] sm:$0xff]
    %v185 = vld [vmem:[#allocation5 + $0x220] sm:$0xff]
    %v186 = vld [vmem:[#allocation5 + $0x228] sm:$0xff]
    %v187 = vld [vmem:[#allocation5 + $0x230] sm:$0xff]
    %v188 = vld [vmem:[#allocation5 + $0x238] sm:$0xff]
    %v189 = vld [vmem:[#allocation5 + $0x240] sm:$0xff]
    %v190 = vld [vmem:[#allocation5 + $0x248] sm:$0xff]
    %v191 = vld [vmem:[#allocation5 + $0x250] sm:$0xff]
    %v192 = vld [vmem:[#allocation5 + $0x258] sm:$0xff]
    %v193 = vld [vmem:[#allocation5 + $0x260] sm:$0xff]
    %v194 = vld [vmem:[#allocation5 + $0x268] sm:$0xff]
    %v195 = vld [vmem:[#allocation5 + $0x270] sm:$0xff]
    %v196 = vld [vmem:[#allocation5 + $0x278] sm:$0xff]
    %v197 = vld [vmem:[#allocation5 + $0x280] sm:$0xff]
    %v198 = vld [vmem:[#allocation5 + $0x288] sm:$0xff]
    %v199 = vld [vmem:[#allocation5 + $0x290] sm:$0xff]
    %v200 = vld [vmem:[#allocation5 + $0x298] sm:$0xff]
    %v201 = vld [vmem:[#allocation5 + $0x2a0] sm:$0xff]
    %v202 = vld [vmem:[#allocation5 + $0x2a8] sm:$0xff]
    %v203 = vld [vmem:[#allocation5 + $0x2b0] sm:$0xff]
    %v204 = vld [vmem:[#allocation5 + $0x2b8] sm:$0xff]
    %v205 = vld [vmem:[#allocation5 + $0x2c0] sm:$0xff]
    %v206 = vld [vmem:[#allocation5 + $0x2c8] sm:$0xff]
    %v207 = vld [vmem:[#allocation5 + $0x2d0] sm:$0xff]
    %v208 = vld [vmem:[#allocation5 + $0x2d8] sm:$0xff]
    %v209 = vld [vmem:[#allocation5 + $0x2e0] sm:$0xff]
    %v210 = vld [vmem:[#allocation5 + $0x2e8] sm:$0xff]
    %v211 = vld [vmem:[#allocation5 + $0x2f0] sm:$0xff]
    %v212 = vld [vmem:[#allocation5 + $0x2f8] sm:$0xff]
    %v213 = vld [vmem:[#allocation5 + $0x300] sm:$0xff]
    %v214 = vld [vmem:[#allocation5 + $0x308] sm:$0xff]
    %v215 = vld [vmem:[#allocation5 + $0x310] sm:$0xff]
    %v216 = vld [vmem:[#allocation5 + $0x318] sm:$0xff]
    %v217 = vld [vmem:[#allocation5 + $0x320] sm:$0xff]
    %v218 = vld [vmem:[#allocation5 + $0x328] sm:$0xff]
    %v219 = vld [vmem:[#allocation5 + $0x330] sm:$0xff]
    %v220 = vld [vmem:[#allocation5 + $0x338] sm:$0xff]
    %v221 = vld [vmem:[#allocation5 + $0x340] sm:$0xff]
    %v222 = vld [vmem:[#allocation5 + $0x348] sm:$0xff]
    %v223 = vld [vmem:[#allocation5 + $0x350] sm:$0xff]
    %v224 = vld [vmem:[#allocation5 + $0x358] sm:$0xff]
    %v225 = vld [vmem:[#allocation5 + $0x360] sm:$0xff]
    %v226 = vld [vmem:[#allocation5 + $0x368] sm:$0xff]
    %v227 = vld [vmem:[#allocation5 + $0x370] sm:$0xff]
    %v228 = vld [vmem:[#allocation5 + $0x378] sm:$0xff]
    %v229 = vld [vmem:[#allocation5 + $0x380] sm:$0xff]
    %v230 = vld [vmem:[#allocation5 + $0x388] sm:$0xff]
    %v231 = vld [vmem:[#allocation5 + $0x390] sm:$0xff]
    %v232 = vld [vmem:[#allocation5 + $0x398] sm:$0xff]
    %v233 = vld [vmem:[#allocation5 + $0x3a0] sm:$0xff]
    %v234 = vld [vmem:[#allocation5 + $0x3a8] sm:$0xff]
    %v235 = vld [vmem:[#allocation5 + $0x3b0] sm:$0xff]
    %v236 = vld [vmem:[#allocation5 + $0x3b8] sm:$0xff]
    %v237 = vld [vmem:[#allocation5 + $0x3c0] sm:$0xff]
    %v238 = vld [vmem:[#allocation5 + $0x3c8] sm:$0xff]
    %v239 = vld [vmem:[#allocation5 + $0x3d0] sm:$0xff]
    %v240 = vld [vmem:[#allocation5 + $0x3d8] sm:$0xff]
    %v241 = vld [vmem:[#allocation5 + $0x3e0] sm:$0xff]
    %v242 = vld [vmem:[#allocation5 + $0x3e8] sm:$0xff]
    %v243 = vld [vmem:[#allocation5 + $0x3f0] sm:$0xff]
    %v244 = vld [vmem:[#allocation5 + $0x3f8] sm:$0xff]
    %v245 = vld [vmem:[#allocation7] sm:$0xf]
    %v247 = vperm.slane %v245, 0
    %v248 = vperm.slane %v245, 1
    %v249 = vperm.slane %v245, 2
    %v250 = vperm.slane %v245, 3
    %255 = vmatpush.msra.mxu0 %v177
    %256 = vmatpush.msra.mxu0 %v173
    %257 = vmatpush.msra.mxu0 %v169
    %258 = vmatpush.msra.mxu0 %v165
    %259 = vmatpush.msra.mxu0 %v161
    %260 = vmatpush.msra.mxu0 %v157
    %261 = vmatpush.msra.mxu0 %v153
    %262 = vmatpush.msra.mxu0 %v149
    %263 = vmatpush.msra.mxu0 %v145
    %264 = vmatpush.msra.mxu0 %v141
    %265 = vmatpush.msra.mxu0 %v137
    %266 = vmatpush.msra.mxu0 %v133
    %267 = vmatpush.msra.mxu0 %v129
    %268 = vmatpush.msra.mxu0 %v125
    %269 = vmatpush.msra.mxu0 %v121
    %270 = vmatpush.msra.mxu0 %v117
    %271 = vmatmul.f32.gmra.mxu0 %v115
    %v272 = vpop.f32.mrf.mxu0
    %v273 = vadd.f32 %v247, %v272
    %274 = vdwg.mxu0
    %275 = vmatpush.msra.mxu0 %v241
    %276 = vmatpush.msra.mxu0 %v237
    %277 = vmatpush.msra.mxu0 %v233
    %278 = vmatpush.msra.mxu0 %v229
    %279 = vmatpush.msra.mxu0 %v225
    %280 = vmatpush.msra.mxu0 %v221
    %281 = vmatpush.msra.mxu0 %v217
    %282 = vmatpush.msra.mxu0 %v213
    %283 = vmatpush.msra.mxu0 %v209
    %284 = vmatpush.msra.mxu0 %v205
    %285 = vmatpush.msra.mxu0 %v201
    %286 = vmatpush.msra.mxu0 %v197
    %287 = vmatpush.msra.mxu0 %v193
    %288 = vmatpush.msra.mxu0 %v189
    %289 = vmatpush.msra.mxu0 %v185
    %290 = vmatpush.msra.mxu0 %v181
    %291 = vmatmul.f32.gmra.mxu0 %v116
    %v292 = vpop.f32.mrf.mxu0
    %v293 = vadd.f32 %v273, %v292
    %294 = vdwg.mxu0
    %295 = vmatpush.msra.mxu0 %v178
    %296 = vmatpush.msra.mxu0 %v174
    %297 = vmatpush.msra.mxu0 %v170
    %298 = vmatpush.msra.mxu0 %v166
    %299 = vmatpush.msra.mxu0 %v162
    %300 = vmatpush.msra.mxu0 %v158
    %301 = vmatpush.msra.mxu0 %v154
    %302 = vmatpush.msra.mxu0 %v150
    %303 = vmatpush.msra.mxu0 %v146
    %304 = vmatpush.msra.mxu0 %v142
    %305 = vmatpush.msra.mxu0 %v138
    %306 = vmatpush.msra.mxu0 %v134
    %307 = vmatpush.msra.mxu0 %v130
    %308 = vmatpush.msra.mxu0 %v126
    %309 = vmatpush.msra.mxu0 %v122
    %310 = vmatpush.msra.mxu0 %v118
    %311 = vmatmul.f32.gmra.mxu0 %v115
    %v312 = vpop.f32.mrf.mxu0
    %v313 = vadd.f32 %v248, %v312
    %314 = vdwg.mxu0
    %315 = vmatpush.msra.mxu0 %v242
    %316 = vmatpush.msra.mxu0 %v238
    %317 = vmatpush.msra.mxu0 %v234
    %318 = vmatpush.msra.mxu0 %v230
    %319 = vmatpush.msra.mxu0 %v226
    %320 = vmatpush.msra.mxu0 %v222
    %321 = vmatpush.msra.mxu0 %v218
    %322 = vmatpush.msra.mxu0 %v214
    %323 = vmatpush.msra.mxu0 %v210
    %324 = vmatpush.msra.mxu0 %v206
    %325 = vmatpush.msra.mxu0 %v202
    %326 = vmatpush.msra.mxu0 %v198
    %327 = vmatpush.msra.mxu0 %v194
    %328 = vmatpush.msra.mxu0 %v190
    %329 = vmatpush.msra.mxu0 %v186
    %330 = vmatpush.msra.mxu0 %v182
    %331 = vmatmul.f32.gmra.mxu0 %v116
    %v332 = vpop.f32.mrf.mxu0
    %v333 = vadd.f32 %v313, %v332
    %334 = vdwg.mxu0
    %335 = vmatpush.msra.mxu0 %v179
    %336 = vmatpush.msra.mxu0 %v175
    %337 = vmatpush.msra.mxu0 %v171
    %338 = vmatpush.msra.mxu0 %v167
    %339 = vmatpush.msra.mxu0 %v163
    %340 = vmatpush.msra.mxu0 %v159
    %341 = vmatpush.msra.mxu0 %v155
    %342 = vmatpush.msra.mxu0 %v151
    %343 = vmatpush.msra.mxu0 %v147
    %344 = vmatpush.msra.mxu0 %v143
    %345 = vmatpush.msra.mxu0 %v139
    %346 = vmatpush.msra.mxu0 %v135
    %347 = vmatpush.msra.mxu0 %v131
    %348 = vmatpush.msra.mxu0 %v127
    %349 = vmatpush.msra.mxu0 %v123
    %350 = vmatpush.msra.mxu0 %v119
    %351 = vmatmul.f32.gmra.mxu0 %v115
    %v352 = vpop.f32.mrf.mxu0
    %v353 = vadd.f32 %v249, %v352
    %354 = vdwg.mxu0
    %355 = vmatpush.msra.mxu0 %v243
    %356 = vmatpush.msra.mxu0 %v239
    %357 = vmatpush.msra.mxu0 %v235
    %358 = vmatpush.msra.mxu0 %v231
    %359 = vmatpush.msra.mxu0 %v227
    %360 = vmatpush.msra.mxu0 %v223
    %361 = vmatpush.msra.mxu0 %v219
    %362 = vmatpush.msra.mxu0 %v215
    %363 = vmatpush.msra.mxu0 %v211
    %364 = vmatpush.msra.mxu0 %v207
    %365 = vmatpush.msra.mxu0 %v203
    %366 = vmatpush.msra.mxu0 %v199
    %367 = vmatpush.msra.mxu0 %v195
    %368 = vmatpush.msra.mxu0 %v191
    %369 = vmatpush.msra.mxu0 %v187
    %370 = vmatpush.msra.mxu0 %v183
    %371 = vmatmul.f32.gmra.mxu0 %v116
    %v372 = vpop.f32.mrf.mxu0
    %v373 = vadd.f32 %v353, %v372
    %374 = vdwg.mxu0
    %375 = vmatpush.msra.mxu0 %v180
    %376 = vmatpush.msra.mxu0 %v176
    %377 = vmatpush.msra.mxu0 %v172
    %378 = vmatpush.msra.mxu0 %v168
    %379 = vmatpush.msra.mxu0 %v164
    %380 = vmatpush.msra.mxu0 %v160
    %381 = vmatpush.msra.mxu0 %v156
    %382 = vmatpush.msra.mxu0 %v152
    %383 = vmatpush.msra.mxu0 %v148
    %384 = vmatpush.msra.mxu0 %v144
    %385 = vmatpush.msra.mxu0 %v140
    %386 = vmatpush.msra.mxu0 %v136
    %387 = vmatpush.msra.mxu0 %v132
    %388 = vmatpush.msra.mxu0 %v128
    %389 = vmatpush.msra.mxu0 %v124
    %390 = vmatpush.msra.mxu0 %v120
    %391 = vmatmul.f32.gmra.mxu0 %v115
    %v392 = vpop.f32.mrf.mxu0
    %v393 = vadd.f32 %v250, %v392
    %394 = vdwg.mxu0
    %395 = vmatpush.msra.mxu0 %v244
    %396 = vmatpush.msra.mxu0 %v240
    %397 = vmatpush.msra.mxu0 %v236
    %398 = vmatpush.msra.mxu0 %v232
    %399 = vmatpush.msra.mxu0 %v228
    %400 = vmatpush.msra.mxu0 %v224
    %401 = vmatpush.msra.mxu0 %v220
    %402 = vmatpush.msra.mxu0 %v216
    %403 = vmatpush.msra.mxu0 %v212
    %404 = vmatpush.msra.mxu0 %v208
    %405 = vmatpush.msra.mxu0 %v204
    %406 = vmatpush.msra.mxu0 %v200
    %407 = vmatpush.msra.mxu0 %v196
    %408 = vmatpush.msra.mxu0 %v192
    %409 = vmatpush.msra.mxu0 %v188
    %410 = vmatpush.msra.mxu0 %v184
    %411 = vmatmul.f32.gmra.mxu0 %v116
    %v412 = vpop.f32.mrf.mxu0
    %v413 = vadd.f32 %v393, %v412
    %414 = vdwg.mxu0
    %vm415 = vcmp.gt.f32.partialorder %v293, 0.0
    %vm416 = vcmp.gt.f32.partialorder %v333, 0.0
    %vm417 = vcmp.gt.f32.partialorder %v373, 0.0
    %vm418 = vcmp.gt.f32.partialorder %v413, 0.0
    %v419 = vmul.f32 %v293, 0.01
    %v420 = vmul.f32 %v333, 0.01
    %v421 = vmul.f32 %v373, 0.01
    %v422 = vmul.f32 %v413, 0.01
    %v423 = vsel %vm415, %v293, %v419
    %v424 = vsel %vm416, %v333, %v420
    %v425 = vsel %vm417, %v373, %v421
    %v426 = vsel %vm418, %v413, %v422
    %v427 = vld [vmem:[#allocation8] sm:$0xff]
    %v428 = vld [vmem:[#allocation8 + $0x8] sm:$0xff]
    %v429 = vld [vmem:[#allocation8 + $0x10] sm:$0xff]
    %v430 = vld [vmem:[#allocation8 + $0x18] sm:$0xff]
    %v431 = vld [vmem:[#allocation8 + $0x20] sm:$0xff]
    %v432 = vld [vmem:[#allocation8 + $0x28] sm:$0xff]
    %v433 = vld [vmem:[#allocation8 + $0x30] sm:$0xff]
    %v434 = vld [vmem:[#allocation8 + $0x38] sm:$0xff]
    %v435 = vld [vmem:[#allocation8 + $0x40] sm:$0xff]
    %v436 = vld [vmem:[#allocation8 + $0x48] sm:$0xff]
    %v437 = vld [vmem:[#allocation8 + $0x50] sm:$0xff]
    %v438 = vld [vmem:[#allocation8 + $0x58] sm:$0xff]
    %v439 = vld [vmem:[#allocation8 + $0x60] sm:$0xff]
    %v440 = vld [vmem:[#allocation8 + $0x68] sm:$0xff]
    %v441 = vld [vmem:[#allocation8 + $0x70] sm:$0xff]
    %v442 = vld [vmem:[#allocation8 + $0x78] sm:$0xff]
    %v443 = vld [vmem:[#allocation8 + $0x80] sm:$0xff]
    %v444 = vld [vmem:[#allocation8 + $0x88] sm:$0xff]
    %v445 = vld [vmem:[#allocation8 + $0x90] sm:$0xff]
    %v446 = vld [vmem:[#allocation8 + $0x98] sm:$0xff]
    %v447 = vld [vmem:[#allocation8 + $0xa0] sm:$0xff]
    %v448 = vld [vmem:[#allocation8 + $0xa8] sm:$0xff]
    %v449 = vld [vmem:[#allocation8 + $0xb0] sm:$0xff]
    %v450 = vld [vmem:[#allocation8 + $0xb8] sm:$0xff]
    %v451 = vld [vmem:[#allocation8 + $0xc0] sm:$0xff]
    %v452 = vld [vmem:[#allocation8 + $0xc8] sm:$0xff]
    %v453 = vld [vmem:[#allocation8 + $0xd0] sm:$0xff]
    %v454 = vld [vmem:[#allocation8 + $0xd8] sm:$0xff]
    %v455 = vld [vmem:[#allocation8 + $0xe0] sm:$0xff]
    %v456 = vld [vmem:[#allocation8 + $0xe8] sm:$0xff]
    %v457 = vld [vmem:[#allocation8 + $0xf0] sm:$0xff]
    %v458 = vld [vmem:[#allocation8 + $0xf8] sm:$0xff]
    %v459 = vld [vmem:[#allocation8 + $0x100] sm:$0xff]
    %v460 = vld [vmem:[#allocation8 + $0x108] sm:$0xff]
    %v461 = vld [vmem:[#allocation8 + $0x110] sm:$0xff]
    %v462 = vld [vmem:[#allocation8 + $0x118] sm:$0xff]
    %v463 = vld [vmem:[#allocation8 + $0x120] sm:$0xff]
    %v464 = vld [vmem:[#allocation8 + $0x128] sm:$0xff]
    %v465 = vld [vmem:[#allocation8 + $0x130] sm:$0xff]
    %v466 = vld [vmem:[#allocation8 + $0x138] sm:$0xff]
    %v467 = vld [vmem:[#allocation8 + $0x140] sm:$0xff]
    %v468 = vld [vmem:[#allocation8 + $0x148] sm:$0xff]
    %v469 = vld [vmem:[#allocation8 + $0x150] sm:$0xff]
    %v470 = vld [vmem:[#allocation8 + $0x158] sm:$0xff]
    %v471 = vld [vmem:[#allocation8 + $0x160] sm:$0xff]
    %v472 = vld [vmem:[#allocation8 + $0x168] sm:$0xff]
    %v473 = vld [vmem:[#allocation8 + $0x170] sm:$0xff]
    %v474 = vld [vmem:[#allocation8 + $0x178] sm:$0xff]
    %v475 = vld [vmem:[#allocation8 + $0x180] sm:$0xff]
    %v476 = vld [vmem:[#allocation8 + $0x188] sm:$0xff]
    %v477 = vld [vmem:[#allocation8 + $0x190] sm:$0xff]
    %v478 = vld [vmem:[#allocation8 + $0x198] sm:$0xff]
    %v479 = vld [vmem:[#allocation8 + $0x1a0] sm:$0xff]
    %v480 = vld [vmem:[#allocation8 + $0x1a8] sm:$0xff]
    %v481 = vld [vmem:[#allocation8 + $0x1b0] sm:$0xff]
    %v482 = vld [vmem:[#allocation8 + $0x1b8] sm:$0xff]
    %v483 = vld [vmem:[#allocation8 + $0x1c0] sm:$0xff]
    %v484 = vld [vmem:[#allocation8 + $0x1c8] sm:$0xff]
    %v485 = vld [vmem:[#allocation8 + $0x1d0] sm:$0xff]
    %v486 = vld [vmem:[#allocation8 + $0x1d8] sm:$0xff]
    %v487 = vld [vmem:[#allocation8 + $0x1e0] sm:$0xff]
    %v488 = vld [vmem:[#allocation8 + $0x1e8] sm:$0xff]
    %v489 = vld [vmem:[#allocation8 + $0x1f0] sm:$0xff]
    %v490 = vld [vmem:[#allocation8 + $0x1f8] sm:$0xff]
    %v491 = vld [vmem:[#allocation8 + $0x200] sm:$0xff]
    %v492 = vld [vmem:[#allocation8 + $0x208] sm:$0xff]
    %v493 = vld [vmem:[#allocation8 + $0x210] sm:$0xff]
    %v494 = vld [vmem:[#allocation8 + $0x218] sm:$0xff]
    %v495 = vld [vmem:[#allocation8 + $0x220] sm:$0xff]
    %v496 = vld [vmem:[#allocation8 + $0x228] sm:$0xff]
    %v497 = vld [vmem:[#allocation8 + $0x230] sm:$0xff]
    %v498 = vld [vmem:[#allocation8 + $0x238] sm:$0xff]
    %v499 = vld [vmem:[#allocation8 + $0x240] sm:$0xff]
    %v500 = vld [vmem:[#allocation8 + $0x248] sm:$0xff]
    %v501 = vld [vmem:[#allocation8 + $0x250] sm:$0xff]
    %v502 = vld [vmem:[#allocation8 + $0x258] sm:$0xff]
    %v503 = vld [vmem:[#allocation8 + $0x260] sm:$0xff]
    %v504 = vld [vmem:[#allocation8 + $0x268] sm:$0xff]
    %v505 = vld [vmem:[#allocation8 + $0x270] sm:$0xff]
    %v506 = vld [vmem:[#allocation8 + $0x278] sm:$0xff]
    %v507 = vld [vmem:[#allocation8 + $0x280] sm:$0xff]
    %v508 = vld [vmem:[#allocation8 + $0x288] sm:$0xff]
    %v509 = vld [vmem:[#allocation8 + $0x290] sm:$0xff]
    %v510 = vld [vmem:[#allocation8 + $0x298] sm:$0xff]
    %v511 = vld [vmem:[#allocation8 + $0x2a0] sm:$0xff]
    %v512 = vld [vmem:[#allocation8 + $0x2a8] sm:$0xff]
    %v513 = vld [vmem:[#allocation8 + $0x2b0] sm:$0xff]
    %v514 = vld [vmem:[#allocation8 + $0x2b8] sm:$0xff]
    %v515 = vld [vmem:[#allocation8 + $0x2c0] sm:$0xff]
    %v516 = vld [vmem:[#allocation8 + $0x2c8] sm:$0xff]
    %v517 = vld [vmem:[#allocation8 + $0x2d0] sm:$0xff]
    %v518 = vld [vmem:[#allocation8 + $0x2d8] sm:$0xff]
    %v519 = vld [vmem:[#allocation8 + $0x2e0] sm:$0xff]
    %v520 = vld [vmem:[#allocation8 + $0x2e8] sm:$0xff]
    %v521 = vld [vmem:[#allocation8 + $0x2f0] sm:$0xff]
    %v522 = vld [vmem:[#allocation8 + $0x2f8] sm:$0xff]
    %v523 = vld [vmem:[#allocation8 + $0x300] sm:$0xff]
    %v524 = vld [vmem:[#allocation8 + $0x308] sm:$0xff]
    %v525 = vld [vmem:[#allocation8 + $0x310] sm:$0xff]
    %v526 = vld [vmem:[#allocation8 + $0x318] sm:$0xff]
    %v527 = vld [vmem:[#allocation8 + $0x320] sm:$0xff]
    %v528 = vld [vmem:[#allocation8 + $0x328] sm:$0xff]
    %v529 = vld [vmem:[#allocation8 + $0x330] sm:$0xff]
    %v530 = vld [vmem:[#allocation8 + $0x338] sm:$0xff]
    %v531 = vld [vmem:[#allocation8 + $0x340] sm:$0xff]
    %v532 = vld [vmem:[#allocation8 + $0x348] sm:$0xff]
    %v533 = vld [vmem:[#allocation8 + $0x350] sm:$0xff]
    %v534 = vld [vmem:[#allocation8 + $0x358] sm:$0xff]
    %v535 = vld [vmem:[#allocation8 + $0x360] sm:$0xff]
    %v536 = vld [vmem:[#allocation8 + $0x368] sm:$0xff]
    %v537 = vld [vmem:[#allocation8 + $0x370] sm:$0xff]
    %v538 = vld [vmem:[#allocation8 + $0x378] sm:$0xff]
    %v539 = vld [vmem:[#allocation8 + $0x380] sm:$0xff]
    %v540 = vld [vmem:[#allocation8 + $0x388] sm:$0xff]
    %v541 = vld [vmem:[#allocation8 + $0x390] sm:$0xff]
    %v542 = vld [vmem:[#allocation8 + $0x398] sm:$0xff]
    %v543 = vld [vmem:[#allocation8 + $0x3a0] sm:$0xff]
    %v544 = vld [vmem:[#allocation8 + $0x3a8] sm:$0xff]
    %v545 = vld [vmem:[#allocation8 + $0x3b0] sm:$0xff]
    %v546 = vld [vmem:[#allocation8 + $0x3b8] sm:$0xff]
    %v547 = vld [vmem:[#allocation8 + $0x3c0] sm:$0xff]
    %v548 = vld [vmem:[#allocation8 + $0x3c8] sm:$0xff]
    %v549 = vld [vmem:[#allocation8 + $0x3d0] sm:$0xff]
    %v550 = vld [vmem:[#allocation8 + $0x3d8] sm:$0xff]
    %v551 = vld [vmem:[#allocation8 + $0x3e0] sm:$0xff]
    %v552 = vld [vmem:[#allocation8 + $0x3e8] sm:$0xff]
    %v553 = vld [vmem:[#allocation8 + $0x3f0] sm:$0xff]
    %v554 = vld [vmem:[#allocation8 + $0x3f8] sm:$0xff]
    %v555 = vld [vmem:[#allocation8 + $0x400] sm:$0xff]
    %v556 = vld [vmem:[#allocation8 + $0x408] sm:$0xff]
    %v557 = vld [vmem:[#allocation8 + $0x410] sm:$0xff]
    %v558 = vld [vmem:[#allocation8 + $0x418] sm:$0xff]
    %v559 = vld [vmem:[#allocation8 + $0x420] sm:$0xff]
    %v560 = vld [vmem:[#allocation8 + $0x428] sm:$0xff]
    %v561 = vld [vmem:[#allocation8 + $0x430] sm:$0xff]
    %v562 = vld [vmem:[#allocation8 + $0x438] sm:$0xff]
    %v563 = vld [vmem:[#allocation8 + $0x440] sm:$0xff]
    %v564 = vld [vmem:[#allocation8 + $0x448] sm:$0xff]
    %v565 = vld [vmem:[#allocation8 + $0x450] sm:$0xff]
    %v566 = vld [vmem:[#allocation8 + $0x458] sm:$0xff]
    %v567 = vld [vmem:[#allocation8 + $0x460] sm:$0xff]
    %v568 = vld [vmem:[#allocation8 + $0x468] sm:$0xff]
    %v569 = vld [vmem:[#allocation8 + $0x470] sm:$0xff]
    %v570 = vld [vmem:[#allocation8 + $0x478] sm:$0xff]
    %v571 = vld [vmem:[#allocation8 + $0x480] sm:$0xff]
    %v572 = vld [vmem:[#allocation8 + $0x488] sm:$0xff]
    %v573 = vld [vmem:[#allocation8 + $0x490] sm:$0xff]
    %v574 = vld [vmem:[#allocation8 + $0x498] sm:$0xff]
    %v575 = vld [vmem:[#allocation8 + $0x4a0] sm:$0xff]
    %v576 = vld [vmem:[#allocation8 + $0x4a8] sm:$0xff]
    %v577 = vld [vmem:[#allocation8 + $0x4b0] sm:$0xff]
    %v578 = vld [vmem:[#allocation8 + $0x4b8] sm:$0xff]
    %v579 = vld [vmem:[#allocation8 + $0x4c0] sm:$0xff]
    %v580 = vld [vmem:[#allocation8 + $0x4c8] sm:$0xff]
    %v581 = vld [vmem:[#allocation8 + $0x4d0] sm:$0xff]
    %v582 = vld [vmem:[#allocation8 + $0x4d8] sm:$0xff]
    %v583 = vld [vmem:[#allocation8 + $0x4e0] sm:$0xff]
    %v584 = vld [vmem:[#allocation8 + $0x4e8] sm:$0xff]
    %v585 = vld [vmem:[#allocation8 + $0x4f0] sm:$0xff]
    %v586 = vld [vmem:[#allocation8 + $0x4f8] sm:$0xff]
    %v587 = vld [vmem:[#allocation8 + $0x500] sm:$0xff]
    %v588 = vld [vmem:[#allocation8 + $0x508] sm:$0xff]
    %v589 = vld [vmem:[#allocation8 + $0x510] sm:$0xff]
    %v590 = vld [vmem:[#allocation8 + $0x518] sm:$0xff]
    %v591 = vld [vmem:[#allocation8 + $0x520] sm:$0xff]
    %v592 = vld [vmem:[#allocation8 + $0x528] sm:$0xff]
    %v593 = vld [vmem:[#allocation8 + $0x530] sm:$0xff]
    %v594 = vld [vmem:[#allocation8 + $0x538] sm:$0xff]
    %v595 = vld [vmem:[#allocation8 + $0x540] sm:$0xff]
    %v596 = vld [vmem:[#allocation8 + $0x548] sm:$0xff]
    %v597 = vld [vmem:[#allocation8 + $0x550] sm:$0xff]
    %v598 = vld [vmem:[#allocation8 + $0x558] sm:$0xff]
    %v599 = vld [vmem:[#allocation8 + $0x560] sm:$0xff]
    %v600 = vld [vmem:[#allocation8 + $0x568] sm:$0xff]
    %v601 = vld [vmem:[#allocation8 + $0x570] sm:$0xff]
    %v602 = vld [vmem:[#allocation8 + $0x578] sm:$0xff]
    %v603 = vld [vmem:[#allocation8 + $0x580] sm:$0xff]
    %v604 = vld [vmem:[#allocation8 + $0x588] sm:$0xff]
    %v605 = vld [vmem:[#allocation8 + $0x590] sm:$0xff]
    %v606 = vld [vmem:[#allocation8 + $0x598] sm:$0xff]
    %v607 = vld [vmem:[#allocation8 + $0x5a0] sm:$0xff]
    %v608 = vld [vmem:[#allocation8 + $0x5a8] sm:$0xff]
    %v609 = vld [vmem:[#allocation8 + $0x5b0] sm:$0xff]
    %v610 = vld [vmem:[#allocation8 + $0x5b8] sm:$0xff]
    %v611 = vld [vmem:[#allocation8 + $0x5c0] sm:$0xff]
    %v612 = vld [vmem:[#allocation8 + $0x5c8] sm:$0xff]
    %v613 = vld [vmem:[#allocation8 + $0x5d0] sm:$0xff]
    %v614 = vld [vmem:[#allocation8 + $0x5d8] sm:$0xff]
    %v615 = vld [vmem:[#allocation8 + $0x5e0] sm:$0xff]
    %v616 = vld [vmem:[#allocation8 + $0x5e8] sm:$0xff]
    %v617 = vld [vmem:[#allocation8 + $0x5f0] sm:$0xff]
    %v618 = vld [vmem:[#allocation8 + $0x5f8] sm:$0xff]
    %v619 = vld [vmem:[#allocation8 + $0x600] sm:$0xff]
    %v620 = vld [vmem:[#allocation8 + $0x608] sm:$0xff]
    %v621 = vld [vmem:[#allocation8 + $0x610] sm:$0xff]
    %v622 = vld [vmem:[#allocation8 + $0x618] sm:$0xff]
    %v623 = vld [vmem:[#allocation8 + $0x620] sm:$0xff]
    %v624 = vld [vmem:[#allocation8 + $0x628] sm:$0xff]
    %v625 = vld [vmem:[#allocation8 + $0x630] sm:$0xff]
    %v626 = vld [vmem:[#allocation8 + $0x638] sm:$0xff]
    %v627 = vld [vmem:[#allocation8 + $0x640] sm:$0xff]
    %v628 = vld [vmem:[#allocation8 + $0x648] sm:$0xff]
    %v629 = vld [vmem:[#allocation8 + $0x650] sm:$0xff]
    %v630 = vld [vmem:[#allocation8 + $0x658] sm:$0xff]
    %v631 = vld [vmem:[#allocation8 + $0x660] sm:$0xff]
    %v632 = vld [vmem:[#allocation8 + $0x668] sm:$0xff]
    %v633 = vld [vmem:[#allocation8 + $0x670] sm:$0xff]
    %v634 = vld [vmem:[#allocation8 + $0x678] sm:$0xff]
    %v635 = vld [vmem:[#allocation8 + $0x680] sm:$0xff]
    %v636 = vld [vmem:[#allocation8 + $0x688] sm:$0xff]
    %v637 = vld [vmem:[#allocation8 + $0x690] sm:$0xff]
    %v638 = vld [vmem:[#allocation8 + $0x698] sm:$0xff]
    %v639 = vld [vmem:[#allocation8 + $0x6a0] sm:$0xff]
    %v640 = vld [vmem:[#allocation8 + $0x6a8] sm:$0xff]
    %v641 = vld [vmem:[#allocation8 + $0x6b0] sm:$0xff]
    %v642 = vld [vmem:[#allocation8 + $0x6b8] sm:$0xff]
    %v643 = vld [vmem:[#allocation8 + $0x6c0] sm:$0xff]
    %v644 = vld [vmem:[#allocation8 + $0x6c8] sm:$0xff]
    %v645 = vld [vmem:[#allocation8 + $0x6d0] sm:$0xff]
    %v646 = vld [vmem:[#allocation8 + $0x6d8] sm:$0xff]
    %v647 = vld [vmem:[#allocation8 + $0x6e0] sm:$0xff]
    %v648 = vld [vmem:[#allocation8 + $0x6e8] sm:$0xff]
    %v649 = vld [vmem:[#allocation8 + $0x6f0] sm:$0xff]
    %v650 = vld [vmem:[#allocation8 + $0x6f8] sm:$0xff]
    %v651 = vld [vmem:[#allocation8 + $0x700] sm:$0xff]
    %v652 = vld [vmem:[#allocation8 + $0x708] sm:$0xff]
    %v653 = vld [vmem:[#allocation8 + $0x710] sm:$0xff]
    %v654 = vld [vmem:[#allocation8 + $0x718] sm:$0xff]
    %v655 = vld [vmem:[#allocation8 + $0x720] sm:$0xff]
    %v656 = vld [vmem:[#allocation8 + $0x728] sm:$0xff]
    %v657 = vld [vmem:[#allocation8 + $0x730] sm:$0xff]
    %v658 = vld [vmem:[#allocation8 + $0x738] sm:$0xff]
    %v659 = vld [vmem:[#allocation8 + $0x740] sm:$0xff]
    %v660 = vld [vmem:[#allocation8 + $0x748] sm:$0xff]
    %v661 = vld [vmem:[#allocation8 + $0x750] sm:$0xff]
    %v662 = vld [vmem:[#allocation8 + $0x758] sm:$0xff]
    %v663 = vld [vmem:[#allocation8 + $0x760] sm:$0xff]
    %v664 = vld [vmem:[#allocation8 + $0x768] sm:$0xff]
    %v665 = vld [vmem:[#allocation8 + $0x770] sm:$0xff]
    %v666 = vld [vmem:[#allocation8 + $0x778] sm:$0xff]
    %v667 = vld [vmem:[#allocation8 + $0x780] sm:$0xff]
    %v668 = vld [vmem:[#allocation8 + $0x788] sm:$0xff]
    %v669 = vld [vmem:[#allocation8 + $0x790] sm:$0xff]
    %v670 = vld [vmem:[#allocation8 + $0x798] sm:$0xff]
    %v671 = vld [vmem:[#allocation8 + $0x7a0] sm:$0xff]
    %v672 = vld [vmem:[#allocation8 + $0x7a8] sm:$0xff]
    %v673 = vld [vmem:[#allocation8 + $0x7b0] sm:$0xff]
    %v674 = vld [vmem:[#allocation8 + $0x7b8] sm:$0xff]
    %v675 = vld [vmem:[#allocation8 + $0x7c0] sm:$0xff]
    %v676 = vld [vmem:[#allocation8 + $0x7c8] sm:$0xff]
    %v677 = vld [vmem:[#allocation8 + $0x7d0] sm:$0xff]
    %v678 = vld [vmem:[#allocation8 + $0x7d8] sm:$0xff]
    %v679 = vld [vmem:[#allocation8 + $0x7e0] sm:$0xff]
    %v680 = vld [vmem:[#allocation8 + $0x7e8] sm:$0xff]
    %v681 = vld [vmem:[#allocation8 + $0x7f0] sm:$0xff]
    %v682 = vld [vmem:[#allocation8 + $0x7f8] sm:$0xff]
    %v683 = vld [vmem:[#allocation10] sm:$0xf]
    %v685 = vperm.slane %v683, 0
    %v686 = vperm.slane %v683, 1
    %v687 = vperm.slane %v683, 2
    %v688 = vperm.slane %v683, 3
    %693 = vmatpush.msra.mxu0 %v487
    %694 = vmatpush.msra.mxu0 %v483
    %695 = vmatpush.msra.mxu0 %v479
    %696 = vmatpush.msra.mxu0 %v475
    %697 = vmatpush.msra.mxu0 %v471
    %698 = vmatpush.msra.mxu0 %v467
    %699 = vmatpush.msra.mxu0 %v463
    %700 = vmatpush.msra.mxu0 %v459
    %701 = vmatpush.msra.mxu0 %v455
    %702 = vmatpush.msra.mxu0 %v451
    %703 = vmatpush.msra.mxu0 %v447
    %704 = vmatpush.msra.mxu0 %v443
    %705 = vmatpush.msra.mxu0 %v439
    %706 = vmatpush.msra.mxu0 %v435
    %707 = vmatpush.msra.mxu0 %v431
    %708 = vmatpush.msra.mxu0 %v427
    %709 = vmatmul.f32.gmra.mxu0 %v423
    %v710 = vpop.f32.mrf.mxu0
    %v711 = vadd.f32 %v685, %v710
    %712 = vdwg.mxu0
    %713 = vmatpush.msra.mxu0 %v551
    %714 = vmatpush.msra.mxu0 %v547
    %715 = vmatpush.msra.mxu0 %v543
    %716 = vmatpush.msra.mxu0 %v539
    %717 = vmatpush.msra.mxu0 %v535
    %718 = vmatpush.msra.mxu0 %v531
    %719 = vmatpush.msra.mxu0 %v527
    %720 = vmatpush.msra.mxu0 %v523
    %721 = vmatpush.msra.mxu0 %v519
    %722 = vmatpush.msra.mxu0 %v515
    %723 = vmatpush.msra.mxu0 %v511
    %724 = vmatpush.msra.mxu0 %v507
    %725 = vmatpush.msra.mxu0 %v503
    %726 = vmatpush.msra.mxu0 %v499
    %727 = vmatpush.msra.mxu0 %v495
    %728 = vmatpush.msra.mxu0 %v491
    %729 = vmatmul.f32.gmra.mxu0 %v424
    %v730 = vpop.f32.mrf.mxu0
    %v731 = vadd.f32 %v711, %v730
    %732 = vdwg.mxu0
    %733 = vmatpush.msra.mxu0 %v615
    %734 = vmatpush.msra.mxu0 %v611
    %735 = vmatpush.msra.mxu0 %v607
    %736 = vmatpush.msra.mxu0 %v603
    %737 = vmatpush.msra.mxu0 %v599
    %738 = vmatpush.msra.mxu0 %v595
    %739 = vmatpush.msra.mxu0 %v591
    %740 = vmatpush.msra.mxu0 %v587
    %741 = vmatpush.msra.mxu0 %v583
    %742 = vmatpush.msra.mxu0 %v579
    %743 = vmatpush.msra.mxu0 %v575
    %744 = vmatpush.msra.mxu0 %v571
    %745 = vmatpush.msra.mxu0 %v567
    %746 = vmatpush.msra.mxu0 %v563
    %747 = vmatpush.msra.mxu0 %v559
    %748 = vmatpush.msra.mxu0 %v555
    %749 = vmatmul.f32.gmra.mxu0 %v425
    %v750 = vpop.f32.mrf.mxu0
    %v751 = vadd.f32 %v731, %v750
    %752 = vdwg.mxu0
    %753 = vmatpush.msra.mxu0 %v679
    %754 = vmatpush.msra.mxu0 %v675
    %755 = vmatpush.msra.mxu0 %v671
    %756 = vmatpush.msra.mxu0 %v667
    %757 = vmatpush.msra.mxu0 %v663
    %758 = vmatpush.msra.mxu0 %v659
    %759 = vmatpush.msra.mxu0 %v655
    %760 = vmatpush.msra.mxu0 %v651
    %761 = vmatpush.msra.mxu0 %v647
    %762 = vmatpush.msra.mxu0 %v643
    %763 = vmatpush.msra.mxu0 %v639
    %764 = vmatpush.msra.mxu0 %v635
    %765 = vmatpush.msra.mxu0 %v631
    %766 = vmatpush.msra.mxu0 %v627
    %767 = vmatpush.msra.mxu0 %v623
    %768 = vmatpush.msra.mxu0 %v619
    %769 = vmatmul.f32.gmra.mxu0 %v426
    %v770 = vpop.f32.mrf.mxu0
    %v771 = vadd.f32 %v751, %v770
    %772 = vdwg.mxu0
    %773 = vmatpush.msra.mxu0 %v488
    %774 = vmatpush.msra.mxu0 %v484
    %775 = vmatpush.msra.mxu0 %v480
    %776 = vmatpush.msra.mxu0 %v476
    %777 = vmatpush.msra.mxu0 %v472
    %778 = vmatpush.msra.mxu0 %v468
    %779 = vmatpush.msra.mxu0 %v464
    %780 = vmatpush.msra.mxu0 %v460
    %781 = vmatpush.msra.mxu0 %v456
    %782 = vmatpush.msra.mxu0 %v452
    %783 = vmatpush.msra.mxu0 %v448
    %784 = vmatpush.msra.mxu0 %v444
    %785 = vmatpush.msra.mxu0 %v440
    %786 = vmatpush.msra.mxu0 %v436
    %787 = vmatpush.msra.mxu0 %v432
    %788 = vmatpush.msra.mxu0 %v428
    %789 = vmatmul.f32.gmra.mxu0 %v423
    %v790 = vpop.f32.mrf.mxu0
    %v791 = vadd.f32 %v686, %v790
    %792 = vdwg.mxu0
    %793 = vmatpush.msra.mxu0 %v552
    %794 = vmatpush.msra.mxu0 %v548
    %795 = vmatpush.msra.mxu0 %v544
    %796 = vmatpush.msra.mxu0 %v540
    %797 = vmatpush.msra.mxu0 %v536
    %798 = vmatpush.msra.mxu0 %v532
    %799 = vmatpush.msra.mxu0 %v528
    %800 = vmatpush.msra.mxu0 %v524
    %801 = vmatpush.msra.mxu0 %v520
    %802 = vmatpush.msra.mxu0 %v516
    %803 = vmatpush.msra.mxu0 %v512
    %804 = vmatpush.msra.mxu0 %v508
    %805 = vmatpush.msra.mxu0 %v504
    %806 = vmatpush.msra.mxu0 %v500
    %807 = vmatpush.msra.mxu0 %v496
    %808 = vmatpush.msra.mxu0 %v492
    %809 = vmatmul.f32.gmra.mxu0 %v424
    %v810 = vpop.f32.mrf.mxu0
    %v811 = vadd.f32 %v791, %v810
    %812 = vdwg.mxu0
    %813 = vmatpush.msra.mxu0 %v616
    %814 = vmatpush.msra.mxu0 %v612
    %815 = vmatpush.msra.mxu0 %v608
    %816 = vmatpush.msra.mxu0 %v604
    %817 = vmatpush.msra.mxu0 %v600
    %818 = vmatpush.msra.mxu0 %v596
    %819 = vmatpush.msra.mxu0 %v592
    %820 = vmatpush.msra.mxu0 %v588
    %821 = vmatpush.msra.mxu0 %v584
    %822 = vmatpush.msra.mxu0 %v580
    %823 = vmatpush.msra.mxu0 %v576
    %824 = vmatpush.msra.mxu0 %v572
    %825 = vmatpush.msra.mxu0 %v568
    %826 = vmatpush.msra.mxu0 %v564
    %827 = vmatpush.msra.mxu0 %v560
    %828 = vmatpush.msra.mxu0 %v556
    %829 = vmatmul.f32.gmra.mxu0 %v425
    %v830 = vpop.f32.mrf.mxu0
    %v831 = vadd.f32 %v811, %v830
    %832 = vdwg.mxu0
    %833 = vmatpush.msra.mxu0 %v680
    %834 = vmatpush.msra.mxu0 %v676
    %835 = vmatpush.msra.mxu0 %v672
    %836 = vmatpush.msra.mxu0 %v668
    %837 = vmatpush.msra.mxu0 %v664
    %838 = vmatpush.msra.mxu0 %v660
    %839 = vmatpush.msra.mxu0 %v656
    %840 = vmatpush.msra.mxu0 %v652
    %841 = vmatpush.msra.mxu0 %v648
    %842 = vmatpush.msra.mxu0 %v644
    %843 = vmatpush.msra.mxu0 %v640
    %844 = vmatpush.msra.mxu0 %v636
    %845 = vmatpush.msra.mxu0 %v632
    %846 = vmatpush.msra.mxu0 %v628
    %847 = vmatpush.msra.mxu0 %v624
    %848 = vmatpush.msra.mxu0 %v620
    %849 = vmatmul.f32.gmra.mxu0 %v426
    %v850 = vpop.f32.mrf.mxu0
    %v851 = vadd.f32 %v831, %v850
    %852 = vdwg.mxu0
    %853 = vmatpush.msra.mxu0 %v489
    %854 = vmatpush.msra.mxu0 %v485
    %855 = vmatpush.msra.mxu0 %v481
    %856 = vmatpush.msra.mxu0 %v477
    %857 = vmatpush.msra.mxu0 %v473
    %858 = vmatpush.msra.mxu0 %v469
    %859 = vmatpush.msra.mxu0 %v465
    %860 = vmatpush.msra.mxu0 %v461
    %861 = vmatpush.msra.mxu0 %v457
    %862 = vmatpush.msra.mxu0 %v453
    %863 = vmatpush.msra.mxu0 %v449
    %864 = vmatpush.msra.mxu0 %v445
    %865 = vmatpush.msra.mxu0 %v441
    %866 = vmatpush.msra.mxu0 %v437
    %867 = vmatpush.msra.mxu0 %v433
    %868 = vmatpush.msra.mxu0 %v429
    %869 = vmatmul.f32.gmra.mxu0 %v423
    %v870 = vpop.f32.mrf.mxu0
    %v871 = vadd.f32 %v687, %v870
    %872 = vdwg.mxu0
    %873 = vmatpush.msra.mxu0 %v553
    %874 = vmatpush.msra.mxu0 %v549
    %875 = vmatpush.msra.mxu0 %v545
    %876 = vmatpush.msra.mxu0 %v541
    %877 = vmatpush.msra.mxu0 %v537
    %878 = vmatpush.msra.mxu0 %v533
    %879 = vmatpush.msra.mxu0 %v529
    %880 = vmatpush.msra.mxu0 %v525
    %881 = vmatpush.msra.mxu0 %v521
    %882 = vmatpush.msra.mxu0 %v517
    %883 = vmatpush.msra.mxu0 %v513
    %884 = vmatpush.msra.mxu0 %v509
    %885 = vmatpush.msra.mxu0 %v505
    %886 = vmatpush.msra.mxu0 %v501
    %887 = vmatpush.msra.mxu0 %v497
    %888 = vmatpush.msra.mxu0 %v493
    %889 = vmatmul.f32.gmra.mxu0 %v424
    %v890 = vpop.f32.mrf.mxu0
    %v891 = vadd.f32 %v871, %v890
    %892 = vdwg.mxu0
    %893 = vmatpush.msra.mxu0 %v617
    %894 = vmatpush.msra.mxu0 %v613
    %895 = vmatpush.msra.mxu0 %v609
    %896 = vmatpush.msra.mxu0 %v605
    %897 = vmatpush.msra.mxu0 %v601
    %898 = vmatpush.msra.mxu0 %v597
    %899 = vmatpush.msra.mxu0 %v593
    %900 = vmatpush.msra.mxu0 %v589
    %901 = vmatpush.msra.mxu0 %v585
    %902 = vmatpush.msra.mxu0 %v581
    %903 = vmatpush.msra.mxu0 %v577
    %904 = vmatpush.msra.mxu0 %v573
    %905 = vmatpush.msra.mxu0 %v569
    %906 = vmatpush.msra.mxu0 %v565
    %907 = vmatpush.msra.mxu0 %v561
    %908 = vmatpush.msra.mxu0 %v557
    %909 = vmatmul.f32.gmra.mxu0 %v425
    %v910 = vpop.f32.mrf.mxu0
    %v911 = vadd.f32 %v891, %v910
    %912 = vdwg.mxu0
    %913 = vmatpush.msra.mxu0 %v681
    %914 = vmatpush.msra.mxu0 %v677
    %915 = vmatpush.msra.mxu0 %v673
    %916 = vmatpush.msra.mxu0 %v669
    %917 = vmatpush.msra.mxu0 %v665
    %918 = vmatpush.msra.mxu0 %v661
    %919 = vmatpush.msra.mxu0 %v657
    %920 = vmatpush.msra.mxu0 %v653
    %921 = vmatpush.msra.mxu0 %v649
    %922 = vmatpush.msra.mxu0 %v645
    %923 = vmatpush.msra.mxu0 %v641
    %924 = vmatpush.msra.mxu0 %v637
    %925 = vmatpush.msra.mxu0 %v633
    %926 = vmatpush.msra.mxu0 %v629
    %927 = vmatpush.msra.mxu0 %v625
    %928 = vmatpush.msra.mxu0 %v621
    %929 = vmatmul.f32.gmra.mxu0 %v426
    %v930 = vpop.f32.mrf.mxu0
    %v931 = vadd.f32 %v911, %v930
    %932 = vdwg.mxu0
    %933 = vmatpush.msra.mxu0 %v490
    %934 = vmatpush.msra.mxu0 %v486
    %935 = vmatpush.msra.mxu0 %v482
    %936 = vmatpush.msra.mxu0 %v478
    %937 = vmatpush.msra.mxu0 %v474
    %938 = vmatpush.msra.mxu0 %v470
    %939 = vmatpush.msra.mxu0 %v466
    %940 = vmatpush.msra.mxu0 %v462
    %941 = vmatpush.msra.mxu0 %v458
    %942 = vmatpush.msra.mxu0 %v454
    %943 = vmatpush.msra.mxu0 %v450
    %944 = vmatpush.msra.mxu0 %v446
    %945 = vmatpush.msra.mxu0 %v442
    %946 = vmatpush.msra.mxu0 %v438
    %947 = vmatpush.msra.mxu0 %v434
    %948 = vmatpush.msra.mxu0 %v430
    %949 = vmatmul.f32.gmra.mxu0 %v423
    %v950 = vpop.f32.mrf.mxu0
    %v951 = vadd.f32 %v688, %v950
    %952 = vdwg.mxu0
    %953 = vmatpush.msra.mxu0 %v554
    %954 = vmatpush.msra.mxu0 %v550
    %955 = vmatpush.msra.mxu0 %v546
    %956 = vmatpush.msra.mxu0 %v542
    %957 = vmatpush.msra.mxu0 %v538
    %958 = vmatpush.msra.mxu0 %v534
    %959 = vmatpush.msra.mxu0 %v530
    %960 = vmatpush.msra.mxu0 %v526
    %961 = vmatpush.msra.mxu0 %v522
    %962 = vmatpush.msra.mxu0 %v518
    %963 = vmatpush.msra.mxu0 %v514
    %964 = vmatpush.msra.mxu0 %v510
    %965 = vmatpush.msra.mxu0 %v506
    %966 = vmatpush.msra.mxu0 %v502
    %967 = vmatpush.msra.mxu0 %v498
    %968 = vmatpush.msra.mxu0 %v494
    %969 = vmatmul.f32.gmra.mxu0 %v424
    %v970 = vpop.f32.mrf.mxu0
    %v971 = vadd.f32 %v951, %v970
    %972 = vdwg.mxu0
    %973 = vmatpush.msra.mxu0 %v618
    %974 = vmatpush.msra.mxu0 %v614
    %975 = vmatpush.msra.mxu0 %v610
    %976 = vmatpush.msra.mxu0 %v606
    %977 = vmatpush.msra.mxu0 %v602
    %978 = vmatpush.msra.mxu0 %v598
    %979 = vmatpush.msra.mxu0 %v594
    %980 = vmatpush.msra.mxu0 %v590
    %981 = vmatpush.msra.mxu0 %v586
    %982 = vmatpush.msra.mxu0 %v582
    %983 = vmatpush.msra.mxu0 %v578
    %984 = vmatpush.msra.mxu0 %v574
    %985 = vmatpush.msra.mxu0 %v570
    %986 = vmatpush.msra.mxu0 %v566
    %987 = vmatpush.msra.mxu0 %v562
    %988 = vmatpush.msra.mxu0 %v558
    %989 = vmatmul.f32.gmra.mxu0 %v425
    %v990 = vpop.f32.mrf.mxu0
    %v991 = vadd.f32 %v971, %v990
    %992 = vdwg.mxu0
    %993 = vmatpush.msra.mxu0 %v682
    %994 = vmatpush.msra.mxu0 %v678
    %995 = vmatpush.msra.mxu0 %v674
    %996 = vmatpush.msra.mxu0 %v670
    %997 = vmatpush.msra.mxu0 %v666
    %998 = vmatpush.msra.mxu0 %v662
    %999 = vmatpush.msra.mxu0 %v658
    %1000 = vmatpush.msra.mxu0 %v654
    %1001 = vmatpush.msra.mxu0 %v650
    %1002 = vmatpush.msra.mxu0 %v646
    %1003 = vmatpush.msra.mxu0 %v642
    %1004 = vmatpush.msra.mxu0 %v638
    %1005 = vmatpush.msra.mxu0 %v634
    %1006 = vmatpush.msra.mxu0 %v630
    %1007 = vmatpush.msra.mxu0 %v626
    %1008 = vmatpush.msra.mxu0 %v622
    %1009 = vmatmul.f32.gmra.mxu0 %v426
    %v1010 = vpop.f32.mrf.mxu0
    %v1011 = vadd.f32 %v991, %v1010
    %1012 = vdwg.mxu0
    %vm1013 = vcmp.gt.f32.partialorder %v771, 0.0
    %vm1014 = vcmp.gt.f32.partialorder %v851, 0.0
    %vm1015 = vcmp.gt.f32.partialorder %v931, 0.0
    %vm1016 = vcmp.gt.f32.partialorder %v1011, 0.0
    %v1017 = vmul.f32 %v771, 0.01
    %v1018 = vmul.f32 %v851, 0.01
    %v1019 = vmul.f32 %v931, 0.01
    %v1020 = vmul.f32 %v1011, 0.01
    %v1021 = vsel %vm1013, %v771, %v1017
    %v1022 = vsel %vm1014, %v851, %v1018
    %v1023 = vsel %vm1015, %v931, %v1019
    %v1024 = vsel %vm1016, %v1011, %v1020
    %v1025 = vld [vmem:[#allocation11] sm:$0xff]
    %v1026 = vld [vmem:[#allocation11 + $0x8] sm:$0xff]
    %v1027 = vld [vmem:[#allocation11 + $0x10] sm:$0xff]
    %v1028 = vld [vmem:[#allocation11 + $0x18] sm:$0xff]
    %v1029 = vld [vmem:[#allocation11 + $0x20] sm:$0xff]
    %v1030 = vld [vmem:[#allocation11 + $0x28] sm:$0xff]
    %v1031 = vld [vmem:[#allocation11 + $0x30] sm:$0xff]
    %v1032 = vld [vmem:[#allocation11 + $0x38] sm:$0xff]
    %v1033 = vld [vmem:[#allocation11 + $0x40] sm:$0xff]
    %v1034 = vld [vmem:[#allocation11 + $0x48] sm:$0xff]
    %v1035 = vld [vmem:[#allocation11 + $0x50] sm:$0xff]
    %v1036 = vld [vmem:[#allocation11 + $0x58] sm:$0xff]
    %v1037 = vld [vmem:[#allocation11 + $0x60] sm:$0xff]
    %v1038 = vld [vmem:[#allocation11 + $0x68] sm:$0xff]
    %v1039 = vld [vmem:[#allocation11 + $0x70] sm:$0xff]
    %v1040 = vld [vmem:[#allocation11 + $0x78] sm:$0xff]
    %v1041 = vld [vmem:[#allocation11 + $0x80] sm:$0xff]
    %v1042 = vld [vmem:[#allocation11 + $0x88] sm:$0xff]
    %v1043 = vld [vmem:[#allocation11 + $0x90] sm:$0xff]
    %v1044 = vld [vmem:[#allocation11 + $0x98] sm:$0xff]
    %v1045 = vld [vmem:[#allocation11 + $0xa0] sm:$0xff]
    %v1046 = vld [vmem:[#allocation11 + $0xa8] sm:$0xff]
    %v1047 = vld [vmem:[#allocation11 + $0xb0] sm:$0xff]
    %v1048 = vld [vmem:[#allocation11 + $0xb8] sm:$0xff]
    %v1049 = vld [vmem:[#allocation11 + $0xc0] sm:$0xff]
    %v1050 = vld [vmem:[#allocation11 + $0xc8] sm:$0xff]
    %v1051 = vld [vmem:[#allocation11 + $0xd0] sm:$0xff]
    %v1052 = vld [vmem:[#allocation11 + $0xd8] sm:$0xff]
    %v1053 = vld [vmem:[#allocation11 + $0xe0] sm:$0xff]
    %v1054 = vld [vmem:[#allocation11 + $0xe8] sm:$0xff]
    %v1055 = vld [vmem:[#allocation11 + $0xf0] sm:$0xff]
    %v1056 = vld [vmem:[#allocation11 + $0xf8] sm:$0xff]
    %v1057 = vld [vmem:[#allocation11 + $0x100] sm:$0xff]
    %v1058 = vld [vmem:[#allocation11 + $0x108] sm:$0xff]
    %v1059 = vld [vmem:[#allocation11 + $0x110] sm:$0xff]
    %v1060 = vld [vmem:[#allocation11 + $0x118] sm:$0xff]
    %v1061 = vld [vmem:[#allocation11 + $0x120] sm:$0xff]
    %v1062 = vld [vmem:[#allocation11 + $0x128] sm:$0xff]
    %v1063 = vld [vmem:[#allocation11 + $0x130] sm:$0xff]
    %v1064 = vld [vmem:[#allocation11 + $0x138] sm:$0xff]
    %v1065 = vld [vmem:[#allocation11 + $0x140] sm:$0xff]
    %v1066 = vld [vmem:[#allocation11 + $0x148] sm:$0xff]
    %v1067 = vld [vmem:[#allocation11 + $0x150] sm:$0xff]
    %v1068 = vld [vmem:[#allocation11 + $0x158] sm:$0xff]
    %v1069 = vld [vmem:[#allocation11 + $0x160] sm:$0xff]
    %v1070 = vld [vmem:[#allocation11 + $0x168] sm:$0xff]
    %v1071 = vld [vmem:[#allocation11 + $0x170] sm:$0xff]
    %v1072 = vld [vmem:[#allocation11 + $0x178] sm:$0xff]
    %v1073 = vld [vmem:[#allocation11 + $0x180] sm:$0xff]
    %v1074 = vld [vmem:[#allocation11 + $0x188] sm:$0xff]
    %v1075 = vld [vmem:[#allocation11 + $0x190] sm:$0xff]
    %v1076 = vld [vmem:[#allocation11 + $0x198] sm:$0xff]
    %v1077 = vld [vmem:[#allocation11 + $0x1a0] sm:$0xff]
    %v1078 = vld [vmem:[#allocation11 + $0x1a8] sm:$0xff]
    %v1079 = vld [vmem:[#allocation11 + $0x1b0] sm:$0xff]
    %v1080 = vld [vmem:[#allocation11 + $0x1b8] sm:$0xff]
    %v1081 = vld [vmem:[#allocation11 + $0x1c0] sm:$0xff]
    %v1082 = vld [vmem:[#allocation11 + $0x1c8] sm:$0xff]
    %v1083 = vld [vmem:[#allocation11 + $0x1d0] sm:$0xff]
    %v1084 = vld [vmem:[#allocation11 + $0x1d8] sm:$0xff]
    %v1085 = vld [vmem:[#allocation11 + $0x1e0] sm:$0xff]
    %v1086 = vld [vmem:[#allocation11 + $0x1e8] sm:$0xff]
    %v1087 = vld [vmem:[#allocation11 + $0x1f0] sm:$0xff]
    %v1088 = vld [vmem:[#allocation11 + $0x1f8] sm:$0xff]
    %v1089 = vld [vmem:[%s6] sm:$0x1]
    %v1091 = vperm.slane %v1089, 0
    %1093 = vmatpush.msra.mxu0 %v1040
    %1094 = vmatpush.msra.mxu0 %v1039
    %1095 = vmatpush.msra.mxu0 %v1038
    %1096 = vmatpush.msra.mxu0 %v1037
    %1097 = vmatpush.msra.mxu0 %v1036
    %1098 = vmatpush.msra.mxu0 %v1035
    %1099 = vmatpush.msra.mxu0 %v1034
    %1100 = vmatpush.msra.mxu0 %v1033
    %1101 = vmatpush.msra.mxu0 %v1032
    %1102 = vmatpush.msra.mxu0 %v1031
    %1103 = vmatpush.msra.mxu0 %v1030
    %1104 = vmatpush.msra.mxu0 %v1029
    %1105 = vmatpush.msra.mxu0 %v1028
    %1106 = vmatpush.msra.mxu0 %v1027
    %1107 = vmatpush.msra.mxu0 %v1026
    %1108 = vmatpush.msra.mxu0 %v1025
    %1109 = vmatmul.f32.gmra.mxu0 %v1021
    %v1110 = vpop.f32.mrf.mxu0
    %v1111 = vadd.f32 %v1091, %v1110
    %1112 = vdwg.mxu0
    %1113 = vmatpush.msra.mxu0 %v1056
    %1114 = vmatpush.msra.mxu0 %v1055
    %1115 = vmatpush.msra.mxu0 %v1054
    %1116 = vmatpush.msra.mxu0 %v1053
    %1117 = vmatpush.msra.mxu0 %v1052
    %1118 = vmatpush.msra.mxu0 %v1051
    %1119 = vmatpush.msra.mxu0 %v1050
    %1120 = vmatpush.msra.mxu0 %v1049
    %1121 = vmatpush.msra.mxu0 %v1048
    %1122 = vmatpush.msra.mxu0 %v1047
    %1123 = vmatpush.msra.mxu0 %v1046
    %1124 = vmatpush.msra.mxu0 %v1045
    %1125 = vmatpush.msra.mxu0 %v1044
    %1126 = vmatpush.msra.mxu0 %v1043
    %1127 = vmatpush.msra.mxu0 %v1042
    %1128 = vmatpush.msra.mxu0 %v1041
    %1129 = vmatmul.f32.gmra.mxu0 %v1022
    %v1130 = vpop.f32.mrf.mxu0
    %v1131 = vadd.f32 %v1111, %v1130
    %1132 = vdwg.mxu0
    %1133 = vmatpush.msra.mxu0 %v1072
    %1134 = vmatpush.msra.mxu0 %v1071
    %1135 = vmatpush.msra.mxu0 %v1070
    %1136 = vmatpush.msra.mxu0 %v1069
    %1137 = vmatpush.msra.mxu0 %v1068
    %1138 = vmatpush.msra.mxu0 %v1067
    %1139 = vmatpush.msra.mxu0 %v1066
    %1140 = vmatpush.msra.mxu0 %v1065
    %1141 = vmatpush.msra.mxu0 %v1064
    %1142 = vmatpush.msra.mxu0 %v1063
    %1143 = vmatpush.msra.mxu0 %v1062
    %1144 = vmatpush.msra.mxu0 %v1061
    %1145 = vmatpush.msra.mxu0 %v1060
    %1146 = vmatpush.msra.mxu0 %v1059
    %1147 = vmatpush.msra.mxu0 %v1058
    %1148 = vmatpush.msra.mxu0 %v1057
    %1149 = vmatmul.f32.gmra.mxu0 %v1023
    %v1150 = vpop.f32.mrf.mxu0
    %v1151 = vadd.f32 %v1131, %v1150
    %1152 = vdwg.mxu0
    %1153 = vmatpush.msra.mxu0 %v1088
    %1154 = vmatpush.msra.mxu0 %v1087
    %1155 = vmatpush.msra.mxu0 %v1086
    %1156 = vmatpush.msra.mxu0 %v1085
    %1157 = vmatpush.msra.mxu0 %v1084
    %1158 = vmatpush.msra.mxu0 %v1083
    %1159 = vmatpush.msra.mxu0 %v1082
    %1160 = vmatpush.msra.mxu0 %v1081
    %1161 = vmatpush.msra.mxu0 %v1080
    %1162 = vmatpush.msra.mxu0 %v1079
    %1163 = vmatpush.msra.mxu0 %v1078
    %1164 = vmatpush.msra.mxu0 %v1077
    %1165 = vmatpush.msra.mxu0 %v1076
    %1166 = vmatpush.msra.mxu0 %v1075
    %1167 = vmatpush.msra.mxu0 %v1074
    %1168 = vmatpush.msra.mxu0 %v1073
    %1169 = vmatmul.f32.gmra.mxu0 %v1024
    %v1170 = vpop.f32.mrf.mxu0
    %v1171 = vadd.f32 %v1151, %v1170
    %1172 = vdwg.mxu0
    %v1173 = vlaneseq
    %v1174 = vand.u32 %v1173, 127
    %vm1175 = vcmp.ge.s32.totalorder %v1174, 32
    %v1176 = vmax.f32 %v1171, 0.0
    %v1177 = vand.u32 2147483647, %v1171
    %v1178 = vsub.f32 0.0, %v1177
    %v1179 = vmul.f32 %v1178, 1.442695
    %v1180 = vpow.pop %v1179
    %v1181 = vadd.f32 %v1180, 1.0
    %v1182 = vlog2.pop %v1181
    %v1183 = vmul.f32 %v1182, 0.6931472
    %v1184 = vmul.f32 -0.5, %v1180
    %v1185 = vadd.f32 %v1184, 1.0
    %v1186 = vmul.f32 %v1185, %v1180
    %v1187 = vand.u32 2147483647, %v1180
    %vm1188 = vcmp.lt.f32.partialorder %v1187, 0.0004427343
    %v1189 = vsel %vm1188, %v1186, %v1183
    %v1190 = vadd.f32 %v1176, %v1189
    %v1191 = vsel %vm1175, %v1190, %v1171
    %1192 = vst [vmem:[#allocation13] sm:$0xff] %v1191
    // Predicated region
    $region54: #{tpu_custom_call.1} parent=1 // pred_check
      _
    $region55: #{tpu_custom_call.1} parent=1 // pred_check_branch
      %1194 = sbr.rel (0) target = $region57
    $region56: #{tpu_custom_call.1} parent=1 // pred_region
      %1196 = vsyncadd [#allocation4], 0
      %s1198 = sshll.u32 [#allocation13], 4
      %s1199 = int_to_ptr.vmem [resolvable:$true] %s1198
      %s1200 = sshll.u32 %s7, 4
      %s1201 = int_to_ptr.hbm [resolvable:$true] %s1200
      %1203 = dma.vmem_to_hbm [thread:$0]  %s1199, 128, %s1201, [#allocation4]
    $region57: #{tpu_custom_call.1} parent=1 // pred_fallthru
      _
    // Predicated region
    $region58: #{tpu_custom_call.1} parent=1 // pred_check
      _
    $region59: #{tpu_custom_call.1} parent=1 // pred_check_branch
      %1205 = sbr.rel (0) target = $region61
    $region60: #{tpu_custom_call.1} parent=1 // pred_region
      %1207 = dma.done [#allocation4], 128
    $region61: #{tpu_custom_call.1} parent=1 // pred_fallthru
      _
    %1208 = vsyncpa [#allocation3], 1
    %1209 = vsyncpa [#allocation6], 1
    %1210 = vsyncpa [#allocation9], 1
    %1211 = vsyncpa [#allocation12], 1
    %1212 = vsyncpa [#allocation4], 1

</llo_original>
